<compile_context>
chip_gen: v5e
topology: v5e:2x2
jax: 0.10.0
libtpu: 0.0.40
codegen_flags: <defaults>
</compile_context>

<pallas_src>
import math
import functools

import jax
import jax.numpy as jnp
from jax import lax
from jax.experimental import pallas as pl
from jax.experimental.pallas import tpu as pltpu
from jax.scipy.linalg import block_diag

# ---- small, module-consistent sizes -------------------------------------------------
B, T = 2, 8
N_HEAD = 4
HEAD_DIM = 8
N_EMBD = N_HEAD * HEAD_DIM        # 32
VOCAB = 64
EPS = 1e-5
NEG_MASK = -1e30                  # finite "minus infinity" for the causal mask


# ---- ALiBi slopes (plain python, matches the PyTorch formula) -------------------------
def _alibi_slopes(n_heads):
    def pow2(n):
        start = 2 ** (-(2 ** (-(math.log2(n) - 3))))
        ratio = start
        return [start * ratio ** i for i in range(n)]

    if n_heads & (n_heads - 1) == 0:
        return pow2(n_heads)
    closest = 2 ** math.floor(math.log2(n_heads))
    slopes = pow2(closest)
    extra_base = 2 ** (-(2 ** (-(math.log2(2 * closest) - 3))))
    slopes += [extra_base * extra_base ** i for i in range(n_heads - closest)]
    return slopes[:n_heads]


# ---- the Pallas kernel ----------------------------------------------------------------
def block_kernel(x_ref, avg_ref,
                 ln1_g_ref, ln1_b_ref, ln2_g_ref, ln2_b_ref,
                 wq_ref, wk_ref, wv_ref, bq_ref, bk_ref, bv_ref,
                 wproj_ref, bproj_ref, slopes_ref,
                 ffnw_ref, ffnb_ref, vocw_ref, voce_ref,
                 out_ref, *, batch, seq):
    f32 = jnp.float32
    bf16 = jnp.bfloat16
    n_rows = batch * seq

    x = x_ref[...]                                  # (N, C) f32
    A = avg_ref[...]                                # (C, C) block-diag averaging matrix (f32)

    def head_ln(z, g, b):
        # One block-averaging matmul on stacked [z ; z*z] gives per-head mean and E[z^2].
        zz = jnp.concatenate([z, z * z], axis=0)                       # (2N, C)
        mom = jnp.dot(zz, A, preferred_element_type=f32)               # (2N, C)
        mu = mom[:n_rows, :]
        var = mom[n_rows:, :] - mu * mu
        return (z - mu) * lax.rsqrt(var + EPS) * g + b

    # ---------------- attention branch ----------------
    h1 = head_ln(x, ln1_g_ref[...], ln1_b_ref[...]).astype(bf16)
    q = jnp.dot(h1, wq_ref[...], preferred_element_type=f32) + bq_ref[...]
    k = jnp.dot(h1, wk_ref[...], preferred_element_type=f32) + bk_ref[...]
    v = jnp.dot(h1, wv_ref[...], preferred_element_type=f32) + bv_ref[...]

    # Re-pack (N, C) -> (H*B, T, hd) with a head-major batch dim (concat + leading-dim
    # reshapes only; no transposes).
    def to_heads(t):
        cols = [t[:, h * HEAD_DIM:(h + 1) * HEAD_DIM].reshape(batch, seq, HEAD_DIM)
                for h in range(N_HEAD)]
        return jnp.concatenate(cols, axis=0)                           # (H*B, T, hd)

    qh = to_heads(q).astype(bf16)
    kh = to_heads(k).astype(bf16)
    vh = to_heads(v).astype(bf16)

    scale = 1.0 / math.sqrt(HEAD_DIM)
    s = jnp.einsum('btd,bsd->bts', qh, kh, preferred_element_type=f32) * scale

    # ALiBi + causal mask generated in-kernel (no O(H*T^2) table DMA'd from HBM).
    row_i = lax.broadcasted_iota(jnp.int32, (seq, seq), 0)
    col_i = lax.broadcasted_iota(jnp.int32, (seq, seq), 1)
    rel = (col_i - row_i).astype(f32)                                  # j - i
    s = s + slopes_ref[...] * rel[None, :, :]                          # (H*B,1,1)*(1,T,T)
    s = jnp.where((col_i <= row_i)[None, :, :], s, NEG_MASK)

    m = jnp.max(s, axis=-1, keepdims=True)
    p = jnp.exp(s - m)
    att = p * pl.reciprocal(jnp.sum(p, axis=-1, keepdims=True), approx=True)
    yh = jnp.einsum('bts,bsd->btd', att.astype(bf16), vh,
                    preferred_element_type=f32)                        # (H*B, T, hd)

    # Assemble per-head outputs into one lane-dense (N, C) slab (no partial stores).
    y_cols = [yh[h * batch:(h + 1) * batch].reshape(n_rows, HEAD_DIM)
              for h in range(N_HEAD)]
    y2d = jnp.concatenate(y_cols, axis=-1).astype(bf16)                # (N, C)

    attn_out = jnp.dot(y2d, wproj_ref[...], preferred_element_type=f32) + bproj_ref[...]
    x1 = x + attn_out                                                  # residual (f32)

    # ---------------- vocabulary-projection FFN branch (block-diag fused) ----------------
    h2 = head_ln(x1, ln2_g_ref[...], ln2_b_ref[...]).astype(bf16)
    fh = jnp.dot(h2, ffnw_ref[...], preferred_element_type=f32) + ffnb_ref[...]   # (N, C)
    logits = jnp.dot(fh.astype(bf16), vocw_ref[...],
                     preferred_element_type=f32)                       # (N, H*V), temp folded

    # Per-head softmax over 64-wide lane segments (reads + reductions only, then one concat).
    w_segs = []
    for h in range(N_HEAD):
        lg = logits[:, h * VOCAB:(h + 1) * VOCAB]
        mh = jnp.max(lg, axis=-1, keepdims=True)
        ph = jnp.exp(lg - mh)
        w_segs.append(ph * pl.reciprocal(jnp.sum(ph, axis=-1, keepdims=True),
                                         approx=True))
    weights = jnp.concatenate(w_segs, axis=-1).astype(bf16)            # (N, H*V)

    ffn_out = jnp.dot(weights, voce_ref[...], preferred_element_type=f32)   # (N, C)

    # TODO(synk): dropout layers are identity here (p=0.0 / eval semantics).
    out_ref[...] = x1 + ffn_out                                        # single full-width write


# ---- wrapper (plain-JAX glue: weight packing, spec setup) -----------------------------
def symbolic_transformer_block(x, params):
    Bx, Tx, C = x.shape
    N = Bx * Tx
    H, hd, V = N_HEAD, HEAD_DIM, VOCAB
    f32, bf16 = jnp.float32, jnp.bfloat16
    x2d = x.reshape(N, C).astype(f32)

    # block-diagonal per-head averaging matrix for the symbolic layer norm (stays f32)
    avg = (jnp.repeat(jnp.repeat(jnp.eye(H, dtype=f32), hd, axis=0), hd, axis=1) / hd)

    ln1_g = jnp.repeat(params["ln1_w"], hd).reshape(1, C).astype(f32)
    ln1_b = jnp.repeat(params["ln1_b"], hd).reshape(1, C).astype(f32)
    ln2_g = jnp.repeat(params["ln2_w"], hd).reshape(1, C).astype(f32)
    ln2_b = jnp.repeat(params["ln2_b"], hd).reshape(1, C).astype(f32)

    # split the fused QKV weight so the kernel never slices a (N, 3C) slab at offsets 32/64
    w_attn = params["w_attn"]
    wq_t = w_attn[:C, :].T.astype(bf16)
    wk_t = w_attn[C:2 * C, :].T.astype(bf16)
    wv_t = w_attn[2 * C:, :].T.astype(bf16)
    bq = params["b_attn"][:C].reshape(1, C).astype(f32)
    bk = params["b_attn"][C:2 * C].reshape(1, C).astype(f32)
    bv = params["b_attn"][2 * C:].reshape(1, C).astype(f32)
    wproj_t = params["w_proj"].T.astype(bf16)
    bproj = params["b_proj"].reshape(1, C).astype(f32)

    # head-major (h, b) slope vector; the full (H, T, T) bias table is built in-kernel
    slopes = jnp.asarray(_alibi_slopes(H), f32)
    slopes_hb = jnp.repeat(slopes, Bx).reshape(H * Bx, 1, 1)

    # block-diagonal packing of the per-head FFN / vocab weights; fold 1/max(temp,0.1)
    inv_temp = 1.0 / jnp.maximum(params["temps"].astype(f32), 0.1)
    ffn_w_bd = block_diag(*[params["ffn_w"][h].T for h in range(H)]).astype(bf16)       # (C, C)
    ffn_b_flat = params["ffn_b"].reshape(1, C).astype(f32)
    vocab_w_bd = block_diag(*[params["vocab_w"][h].T * inv_temp[h]
                              for h in range(H)]).astype(bf16)                          # (C, H*V)
    vocab_e_stack = block_diag(*[params["vocab_emb"][:, h * hd:(h + 1) * hd]
                                 for h in range(H)]).astype(bf16)                       # (H*V, C)

    vmem = pl.BlockSpec(memory_space=pltpu.MemorySpace.VMEM)

    # TODO(synk): at production (B*T, vocab) sizes, add a row-tiled "parallel" grid with
    # explicit vmem_limit_bytes (64 MiB VMEM / 2 TCs on v7x); this single-shot kernel
    # assumes all operands fit VMEM.
    out2d = pl.pallas_call(
        functools.partial(block_kernel, batch=Bx, seq=Tx),
        out_shape=jax.ShapeDtypeStruct((N, C), f32),
        in_specs=[vmem] * 19,
        out_specs=vmem,
    )(x2d, avg, ln1_g, ln1_b, ln2_g, ln2_b,
      wq_t, wk_t, wv_t, bq, bk, bv, wproj_t, bproj, slopes_hb,
      ffn_w_bd, ffn_b_flat, vocab_w_bd, vocab_e_stack)
    return out2d.reshape(Bx, Tx, C)


# ---- pure-JAX reference mirroring the PyTorch forward ---------------------------------
def _alibi_bias_ref(n_head, seq):
    slopes = jnp.asarray(_alibi_slopes(n_head), jnp.float32)
    pos = jnp.arange(seq, dtype=jnp.float32)
    rel = pos[None, :] - pos[:, None]
    bias = slopes[:, None, None] * rel[None, :, :]
    causal = jnp.tril(jnp.ones((seq, seq), dtype=bool))
    return jnp.where(causal[None, :, :], bias, -jnp.inf)


def reference(x, params):
    Bx, Tx, C = x.shape

    def sym_ln(z, cw, cb):
        zh = z.reshape(Bx, Tx, N_HEAD, HEAD_DIM)
        mu = zh.mean(-1, keepdims=True)
        var = ((zh - mu) ** 2).mean(-1, keepdims=True)
        zn = (zh - mu) / jnp.sqrt(var + EPS)
        zn = zn * cw[None, None, :, None] + cb[None, None, :, None]
        return zn.reshape(Bx, Tx, C)

    h1 = sym_ln(x, params["ln1_w"], params["ln1_b"])
    qkv = h1 @ params["w_attn"].T + params["b_attn"]
    q, k, v = jnp.split(qkv, 3, axis=-1)

    def heads(t):
        return t.reshape(Bx, Tx, N_HEAD, HEAD_DIM).transpose(0, 2, 1, 3)

    q, k, v = heads(q), heads(k), heads(v)
    s = jnp.einsum("bhtd,bhsd->bhts", q, k) / math.sqrt(HEAD_DIM)
    s = s + _alibi_bias_ref(N_HEAD, Tx)[None]
    w = jax.nn.softmax(s, axis=-1)
    y = jnp.einsum("bhts,bhsd->bhtd", w, v)
    y = y.transpose(0, 2, 1, 3).reshape(Bx, Tx, C)
    y = y @ params["w_proj"].T + params["b_proj"]
    x1 = x + y

    h2 = sym_ln(x1, params["ln2_w"], params["ln2_b"])
    outs = []
    for h in range(N_HEAD):
        xh = h2[..., h * HEAD_DIM:(h + 1) * HEAD_DIM]
        fh = xh @ params["ffn_w"][h].T + params["ffn_b"][h]
        logits = fh @ params["vocab_w"][h].T
        temp = jnp.maximum(params["temps"][h], 0.1)
        ww = jax.nn.softmax(logits / temp, axis=-1)
        Eh = params["vocab_emb"][:, h * HEAD_DIM:(h + 1) * HEAD_DIM]
        outs.append(ww @ Eh)
    return x1 + jnp.concatenate(outs, axis=-1)


if __name__ == "__main__":
    key = jax.random.PRNGKey(0)
    ks = jax.random.split(key, 13)
    params = dict(
        ln1_w=1.0 + 0.1 * jax.random.normal(ks[0], (N_HEAD,), jnp.float32),
        ln1_b=0.1 * jax.random.normal(ks[1], (N_HEAD,), jnp.float32),
        ln2_w=1.0 + 0.1 * jax.random.normal(ks[2], (N_HEAD,), jnp.float32),
        ln2_b=0.1 * jax.random.normal(ks[3], (N_HEAD,), jnp.float32),
        w_attn=0.02 * jax.random.normal(ks[4], (3 * N_EMBD, N_EMBD), jnp.float32),
        b_attn=0.02 * jax.random.normal(ks[5], (3 * N_EMBD,), jnp.float32),
        w_proj=0.02 * jax.random.normal(ks[6], (N_EMBD, N_EMBD), jnp.float32),
        b_proj=0.02 * jax.random.normal(ks[7], (N_EMBD,), jnp.float32),
        ffn_w=0.02 * jax.random.normal(ks[8], (N_HEAD, HEAD_DIM, HEAD_DIM), jnp.float32),
        ffn_b=0.02 * jax.random.normal(ks[9], (N_HEAD, HEAD_DIM), jnp.float32),
        vocab_w=0.02 * jax.random.normal(ks[10], (N_HEAD, VOCAB, HEAD_DIM), jnp.float32),
        vocab_emb=0.02 * jax.random.normal(ks[11], (VOCAB, N_EMBD), jnp.float32),
        temps=1.0 + 0.2 * jax.random.normal(ks[12], (N_HEAD,), jnp.float32),
    )
    x = jax.random.normal(jax.random.PRNGKey(42), (B, T, N_EMBD), jnp.float32)

    out = jax.block_until_ready(symbolic_transformer_block(x, params))
    ref = reference(x, params)

    assert out.shape == (B, T, N_EMBD)
    assert jnp.allclose(out, ref, rtol=2e-2, atol=2e-2), \
        f"max abs err {float(jnp.max(jnp.abs(out - ref)))}"
    print("KERNEL_OK")
</pallas_src>

<mosaic_0001>
module attributes {stable_mosaic.version = 11 : i64} {
  func.func @block_kernel(%arg0: memref<16x32xf32, #tpu.memory_space<vmem>>, %arg1: memref<32x32xf32, #tpu.memory_space<vmem>>, %arg2: memref<1x32xf32, #tpu.memory_space<vmem>>, %arg3: memref<1x32xf32, #tpu.memory_space<vmem>>, %arg4: memref<1x32xf32, #tpu.memory_space<vmem>>, %arg5: memref<1x32xf32, #tpu.memory_space<vmem>>, %arg6: memref<32x32xbf16, #tpu.memory_space<vmem>>, %arg7: memref<32x32xbf16, #tpu.memory_space<vmem>>, %arg8: memref<32x32xbf16, #tpu.memory_space<vmem>>, %arg9: memref<1x32xf32, #tpu.memory_space<vmem>>, %arg10: memref<1x32xf32, #tpu.memory_space<vmem>>, %arg11: memref<1x32xf32, #tpu.memory_space<vmem>>, %arg12: memref<32x32xbf16, #tpu.memory_space<vmem>>, %arg13: memref<1x32xf32, #tpu.memory_space<vmem>>, %arg14: memref<8x1x1xf32, #tpu.memory_space<vmem>>, %arg15: memref<32x32xbf16, #tpu.memory_space<vmem>>, %arg16: memref<1x32xf32, #tpu.memory_space<vmem>>, %arg17: memref<32x256xbf16, #tpu.memory_space<vmem>>, %arg18: memref<256x32xbf16, #tpu.memory_space<vmem>>, %arg19: memref<16x32xf32, #tpu.memory_space<vmem>>) attributes {dimension_semantics = [], scalar_prefetch = 0 : i64, scratch_operands = 0 : i64, tpu.core_type = #tpu.core_type<tc>} {
    %c0 = arith.constant 0 : index
    %c0_0 = arith.constant 0 : index
    %0 = vector.load %arg0[%c0, %c0_0] : memref<16x32xf32, #tpu.memory_space<vmem>>, vector<16x32xf32>
    %c0_1 = arith.constant 0 : index
    %c0_2 = arith.constant 0 : index
    %1 = vector.load %arg1[%c0_1, %c0_2] : memref<32x32xf32, #tpu.memory_space<vmem>>, vector<32x32xf32>
    %c0_3 = arith.constant 0 : index
    %c0_4 = arith.constant 0 : index
    %2 = vector.load %arg2[%c0_3, %c0_4] : memref<1x32xf32, #tpu.memory_space<vmem>>, vector<1x32xf32>
    %c0_5 = arith.constant 0 : index
    %c0_6 = arith.constant 0 : index
    %3 = vector.load %arg3[%c0_5, %c0_6] : memref<1x32xf32, #tpu.memory_space<vmem>>, vector<1x32xf32>
    %4 = arith.mulf %0, %0 : vector<16x32xf32>
    %5 = tpu.concatenate %0, %4 in 0 : vector<16x32xf32>, vector<16x32xf32> -> vector<32x32xf32>
    %cst = arith.constant dense<0.000000e+00> : vector<32x32xf32>
    %6 = tpu.matmul %5, %1, %cst {dimension_numbers = #tpu.dot_dimension_numbers<[1], [0], [0], [1], [0, 0, 1, 1], [], []>} : vector<32x32xf32>, vector<32x32xf32>, vector<32x32xf32> -> vector<32x32xf32>
    %7 = vector.extract_strided_slice %6 {offsets = [0, 0], sizes = [16, 32], strides = [1, 1]} : vector<32x32xf32> to vector<16x32xf32>
    %8 = vector.extract_strided_slice %6 {offsets = [16, 0], sizes = [16, 32], strides = [1, 1]} : vector<32x32xf32> to vector<16x32xf32>
    %9 = arith.mulf %7, %7 : vector<16x32xf32>
    %10 = arith.subf %8, %9 : vector<16x32xf32>
    %11 = arith.subf %0, %7 : vector<16x32xf32>
    %cst_7 = arith.constant 9.99999974E-6 : f32
    %12 = vector.broadcast %cst_7 : f32 to vector<16x32xf32>
    %13 = arith.addf %10, %12 : vector<16x32xf32>
    %14 = math.rsqrt %13 : vector<16x32xf32>
    %15 = arith.mulf %11, %14 : vector<16x32xf32>
    %16 = vector.broadcast %2 : vector<1x32xf32> to vector<16x32xf32>
    %17 = arith.mulf %15, %16 : vector<16x32xf32>
    %18 = vector.broadcast %3 : vector<1x32xf32> to vector<16x32xf32>
    %19 = arith.addf %17, %18 : vector<16x32xf32>
    %20 = arith.truncf %19 : vector<16x32xf32> to vector<16x32xbf16>
    %c0_8 = arith.constant 0 : index
    %c0_9 = arith.constant 0 : index
    %21 = vector.load %arg6[%c0_8, %c0_9] : memref<32x32xbf16, #tpu.memory_space<vmem>>, vector<32x32xbf16>
    %cst_10 = arith.constant dense<0.000000e+00> : vector<16x32xf32>
    %22 = tpu.matmul %20, %21, %cst_10 {dimension_numbers = #tpu.dot_dimension_numbers<[1], [0], [0], [1], [0, 0, 1, 1], [], []>} : vector<16x32xbf16>, vector<32x32xbf16>, vector<16x32xf32> -> vector<16x32xf32>
    %c0_11 = arith.constant 0 : index
    %c0_12 = arith.constant 0 : index
    %23 = vector.load %arg9[%c0_11, %c0_12] : memref<1x32xf32, #tpu.memory_space<vmem>>, vector<1x32xf32>
    %24 = vector.broadcast %23 : vector<1x32xf32> to vector<16x32xf32>
    %25 = arith.addf %22, %24 : vector<16x32xf32>
    %c0_13 = arith.constant 0 : index
    %c0_14 = arith.constant 0 : index
    %26 = vector.load %arg7[%c0_13, %c0_14] : memref<32x32xbf16, #tpu.memory_space<vmem>>, vector<32x32xbf16>
    %cst_15 = arith.constant dense<0.000000e+00> : vector<16x32xf32>
    %27 = tpu.matmul %20, %26, %cst_15 {dimension_numbers = #tpu.dot_dimension_numbers<[1], [0], [0], [1], [0, 0, 1, 1], [], []>} : vector<16x32xbf16>, vector<32x32xbf16>, vector<16x32xf32> -> vector<16x32xf32>
    %c0_16 = arith.constant 0 : index
    %c0_17 = arith.constant 0 : index
    %28 = vector.load %arg10[%c0_16, %c0_17] : memref<1x32xf32, #tpu.memory_space<vmem>>, vector<1x32xf32>
    %29 = vector.broadcast %28 : vector<1x32xf32> to vector<16x32xf32>
    %30 = arith.addf %27, %29 : vector<16x32xf32>
    %c0_18 = arith.constant 0 : index
    %c0_19 = arith.constant 0 : index
    %31 = vector.load %arg8[%c0_18, %c0_19] : memref<32x32xbf16, #tpu.memory_space<vmem>>, vector<32x32xbf16>
    %cst_20 = arith.constant dense<0.000000e+00> : vector<16x32xf32>
    %32 = tpu.matmul %20, %31, %cst_20 {dimension_numbers = #tpu.dot_dimension_numbers<[1], [0], [0], [1], [0, 0, 1, 1], [], []>} : vector<16x32xbf16>, vector<32x32xbf16>, vector<16x32xf32> -> vector<16x32xf32>
    %c0_21 = arith.constant 0 : index
    %c0_22 = arith.constant 0 : index
    %33 = vector.load %arg11[%c0_21, %c0_22] : memref<1x32xf32, #tpu.memory_space<vmem>>, vector<1x32xf32>
    %34 = vector.broadcast %33 : vector<1x32xf32> to vector<16x32xf32>
    %35 = arith.addf %32, %34 : vector<16x32xf32>
    %36 = vector.extract_strided_slice %25 {offsets = [0, 0], sizes = [16, 8], strides = [1, 1]} : vector<16x32xf32> to vector<16x8xf32>
    %37 = vector.shape_cast %36 : vector<16x8xf32> to vector<2x8x8xf32>
    %38 = vector.extract_strided_slice %25 {offsets = [0, 8], sizes = [16, 8], strides = [1, 1]} : vector<16x32xf32> to vector<16x8xf32>
    %39 = vector.shape_cast %38 : vector<16x8xf32> to vector<2x8x8xf32>
    %40 = vector.extract_strided_slice %25 {offsets = [0, 16], sizes = [16, 8], strides = [1, 1]} : vector<16x32xf32> to vector<16x8xf32>
    %41 = vector.shape_cast %40 : vector<16x8xf32> to vector<2x8x8xf32>
    %42 = vector.extract_strided_slice %25 {offsets = [0, 24], sizes = [16, 8], strides = [1, 1]} : vector<16x32xf32> to vector<16x8xf32>
    %43 = vector.shape_cast %42 : vector<16x8xf32> to vector<2x8x8xf32>
    %44 = tpu.concatenate %37, %39, %41, %43 in 0 : vector<2x8x8xf32>, vector<2x8x8xf32>, vector<2x8x8xf32>, vector<2x8x8xf32> -> vector<8x8x8xf32>
    %45 = arith.truncf %44 : vector<8x8x8xf32> to vector<8x8x8xbf16>
    %46 = vector.extract_strided_slice %30 {offsets = [0, 0], sizes = [16, 8], strides = [1, 1]} : vector<16x32xf32> to vector<16x8xf32>
    %47 = vector.shape_cast %46 : vector<16x8xf32> to vector<2x8x8xf32>
    %48 = vector.extract_strided_slice %30 {offsets = [0, 8], sizes = [16, 8], strides = [1, 1]} : vector<16x32xf32> to vector<16x8xf32>
    %49 = vector.shape_cast %48 : vector<16x8xf32> to vector<2x8x8xf32>
    %50 = vector.extract_strided_slice %30 {offsets = [0, 16], sizes = [16, 8], strides = [1, 1]} : vector<16x32xf32> to vector<16x8xf32>
    %51 = vector.shape_cast %50 : vector<16x8xf32> to vector<2x8x8xf32>
    %52 = vector.extract_strided_slice %30 {offsets = [0, 24], sizes = [16, 8], strides = [1, 1]} : vector<16x32xf32> to vector<16x8xf32>
    %53 = vector.shape_cast %52 : vector<16x8xf32> to vector<2x8x8xf32>
    %54 = tpu.concatenate %47, %49, %51, %53 in 0 : vector<2x8x8xf32>, vector<2x8x8xf32>, vector<2x8x8xf32>, vector<2x8x8xf32> -> vector<8x8x8xf32>
    %55 = arith.truncf %54 : vector<8x8x8xf32> to vector<8x8x8xbf16>
    %56 = vector.extract_strided_slice %35 {offsets = [0, 0], sizes = [16, 8], strides = [1, 1]} : vector<16x32xf32> to vector<16x8xf32>
    %57 = vector.shape_cast %56 : vector<16x8xf32> to vector<2x8x8xf32>
    %58 = vector.extract_strided_slice %35 {offsets = [0, 8], sizes = [16, 8], strides = [1, 1]} : vector<16x32xf32> to vector<16x8xf32>
    %59 = vector.shape_cast %58 : vector<16x8xf32> to vector<2x8x8xf32>
    %60 = vector.extract_strided_slice %35 {offsets = [0, 16], sizes = [16, 8], strides = [1, 1]} : vector<16x32xf32> to vector<16x8xf32>
    %61 = vector.shape_cast %60 : vector<16x8xf32> to vector<2x8x8xf32>
    %62 = vector.extract_strided_slice %35 {offsets = [0, 24], sizes = [16, 8], strides = [1, 1]} : vector<16x32xf32> to vector<16x8xf32>
    %63 = vector.shape_cast %62 : vector<16x8xf32> to vector<2x8x8xf32>
    %64 = tpu.concatenate %57, %59, %61, %63 in 0 : vector<2x8x8xf32>, vector<2x8x8xf32>, vector<2x8x8xf32>, vector<2x8x8xf32> -> vector<8x8x8xf32>
    %65 = arith.truncf %64 : vector<8x8x8xf32> to vector<8x8x8xbf16>
    "tpu.trace_start"() <{level = 10 : i32, message = "btd,bsd->bts"}> : () -> ()
    %cst_23 = arith.constant dense<0.000000e+00> : vector<8x8x8xf32>
    %66 = tpu.matmul %45, %55, %cst_23 {dimension_numbers = #tpu.dot_dimension_numbers<[2], [2], [1], [1], [0, 0, 0, 1, 1, 1], [0], [0]>} : vector<8x8x8xbf16>, vector<8x8x8xbf16>, vector<8x8x8xf32> -> vector<8x8x8xf32>
    "tpu.trace_stop"() : () -> ()
    %cst_24 = arith.constant 0.353553385 : f32
    %67 = vector.broadcast %cst_24 : f32 to vector<8x8x8xf32>
    %68 = arith.mulf %66, %67 : vector<8x8x8xf32>
    %69 = tpu.iota {dimensions = array<i32: 0>} : vector<8x8xi32>
    %70 = tpu.iota {dimensions = array<i32: 1>} : vector<8x8xi32>
    %71 = arith.subi %70, %69 : vector<8x8xi32>
    %72 = arith.sitofp %71 : vector<8x8xi32> to vector<8x8xf32>
    %c0_25 = arith.constant 0 : index
    %c0_26 = arith.constant 0 : index
    %c0_27 = arith.constant 0 : index
    %73 = vector.load %arg14[%c0_25, %c0_26, %c0_27] : memref<8x1x1xf32, #tpu.memory_space<vmem>>, vector<8x1x1xf32>
    %74 = vector.shape_cast %72 : vector<8x8xf32> to vector<1x8x8xf32>
    %75 = vector.broadcast %73 : vector<8x1x1xf32> to vector<8x8x8xf32>
    %76 = vector.broadcast %74 : vector<1x8x8xf32> to vector<8x8x8xf32>
    %77 = arith.mulf %75, %76 : vector<8x8x8xf32>
    %78 = arith.addf %68, %77 : vector<8x8x8xf32>
    %79 = arith.cmpi sle, %70, %69 : vector<8x8xi32>
    %80 = vector.shape_cast %79 : vector<8x8xi1> to vector<1x8x8xi1>
    %cst_28 = arith.constant -1.000000e+30 : f32
    %81 = vector.shape_cast %80 : vector<1x8x8xi1> to vector<1x8x8xi1>
    %82 = vector.broadcast %81 : vector<1x8x8xi1> to vector<8x8x8xi1>
    %83 = vector.broadcast %cst_28 : f32 to vector<8x8x8xf32>
    %84 = arith.select %82, %78, %83 : vector<8x8x8xi1>, vector<8x8x8xf32>
    %cst_29 = arith.constant dense<0xFF800000> : vector<8x8xf32>
    %85 = vector.multi_reduction <maximumf>, %84, %cst_29 [2] : vector<8x8x8xf32> to vector<8x8xf32>
    %86 = vector.shape_cast %85 : vector<8x8xf32> to vector<8x8x1xf32>
    %87 = vector.broadcast %86 : vector<8x8x1xf32> to vector<8x8x8xf32>
    %88 = arith.subf %84, %87 : vector<8x8x8xf32>
    %89 = math.exp %88 : vector<8x8x8xf32>
    %cst_30 = arith.constant dense<0.000000e+00> : vector<8x8xf32>
    %90 = vector.multi_reduction <add>, %89, %cst_30 [2] : vector<8x8x8xf32> to vector<8x8xf32>
    %91 = vector.shape_cast %90 : vector<8x8xf32> to vector<8x8x1xf32>
    %92 = tpu.reciprocal %91 {approx = true} : vector<8x8x1xf32> -> vector<8x8x1xf32>
    %93 = vector.broadcast %92 : vector<8x8x1xf32> to vector<8x8x8xf32>
    %94 = arith.mulf %89, %93 : vector<8x8x8xf32>
    %95 = arith.truncf %94 : vector<8x8x8xf32> to vector<8x8x8xbf16>
    "tpu.trace_start"() <{level = 10 : i32, message = "bts,bsd->btd"}> : () -> ()
    %cst_31 = arith.constant dense<0.000000e+00> : vector<8x8x8xf32>
    %96 = tpu.matmul %95, %65, %cst_31 {dimension_numbers = #tpu.dot_dimension_numbers<[2], [1], [1], [2], [0, 0, 0, 1, 1, 2], [0], [0]>} : vector<8x8x8xbf16>, vector<8x8x8xbf16>, vector<8x8x8xf32> -> vector<8x8x8xf32>
    "tpu.trace_stop"() : () -> ()
    %97 = vector.extract_strided_slice %96 {offsets = [0, 0, 0], sizes = [2, 8, 8], strides = [1, 1, 1]} : vector<8x8x8xf32> to vector<2x8x8xf32>
    %98 = vector.shape_cast %97 : vector<2x8x8xf32> to vector<16x8xf32>
    %99 = vector.extract_strided_slice %96 {offsets = [2, 0, 0], sizes = [2, 8, 8], strides = [1, 1, 1]} : vector<8x8x8xf32> to vector<2x8x8xf32>
    %100 = vector.shape_cast %99 : vector<2x8x8xf32> to vector<16x8xf32>
    %101 = vector.extract_strided_slice %96 {offsets = [4, 0, 0], sizes = [2, 8, 8], strides = [1, 1, 1]} : vector<8x8x8xf32> to vector<2x8x8xf32>
    %102 = vector.shape_cast %101 : vector<2x8x8xf32> to vector<16x8xf32>
    %103 = vector.extract_strided_slice %96 {offsets = [6, 0, 0], sizes = [2, 8, 8], strides = [1, 1, 1]} : vector<8x8x8xf32> to vector<2x8x8xf32>
    %104 = vector.shape_cast %103 : vector<2x8x8xf32> to vector<16x8xf32>
    %105 = tpu.concatenate %98, %100, %102, %104 in 1 : vector<16x8xf32>, vector<16x8xf32>, vector<16x8xf32>, vector<16x8xf32> -> vector<16x32xf32>
    %106 = arith.truncf %105 : vector<16x32xf32> to vector<16x32xbf16>
    %c0_32 = arith.constant 0 : index
    %c0_33 = arith.constant 0 : index
    %107 = vector.load %arg12[%c0_32, %c0_33] : memref<32x32xbf16, #tpu.memory_space<vmem>>, vector<32x32xbf16>
    %cst_34 = arith.constant dense<0.000000e+00> : vector<16x32xf32>
    %108 = tpu.matmul %106, %107, %cst_34 {dimension_numbers = #tpu.dot_dimension_numbers<[1], [0], [0], [1], [0, 0, 1, 1], [], []>} : vector<16x32xbf16>, vector<32x32xbf16>, vector<16x32xf32> -> vector<16x32xf32>
    %c0_35 = arith.constant 0 : index
    %c0_36 = arith.constant 0 : index
    %109 = vector.load %arg13[%c0_35, %c0_36] : memref<1x32xf32, #tpu.memory_space<vmem>>, vector<1x32xf32>
    %110 = vector.broadcast %109 : vector<1x32xf32> to vector<16x32xf32>
    %111 = arith.addf %108, %110 : vector<16x32xf32>
    %112 = arith.addf %0, %111 : vector<16x32xf32>
    %c0_37 = arith.constant 0 : index
    %c0_38 = arith.constant 0 : index
    %113 = vector.load %arg4[%c0_37, %c0_38] : memref<1x32xf32, #tpu.memory_space<vmem>>, vector<1x32xf32>
    %c0_39 = arith.constant 0 : index
    %c0_40 = arith.constant 0 : index
    %114 = vector.load %arg5[%c0_39, %c0_40] : memref<1x32xf32, #tpu.memory_space<vmem>>, vector<1x32xf32>
    %115 = arith.mulf %112, %112 : vector<16x32xf32>
    %116 = tpu.concatenate %112, %115 in 0 : vector<16x32xf32>, vector<16x32xf32> -> vector<32x32xf32>
    %cst_41 = arith.constant dense<0.000000e+00> : vector<32x32xf32>
    %117 = tpu.matmul %116, %1, %cst_41 {dimension_numbers = #tpu.dot_dimension_numbers<[1], [0], [0], [1], [0, 0, 1, 1], [], []>} : vector<32x32xf32>, vector<32x32xf32>, vector<32x32xf32> -> vector<32x32xf32>
    %118 = vector.extract_strided_slice %117 {offsets = [0, 0], sizes = [16, 32], strides = [1, 1]} : vector<32x32xf32> to vector<16x32xf32>
    %119 = vector.extract_strided_slice %117 {offsets = [16, 0], sizes = [16, 32], strides = [1, 1]} : vector<32x32xf32> to vector<16x32xf32>
    %120 = arith.mulf %118, %118 : vector<16x32xf32>
    %121 = arith.subf %119, %120 : vector<16x32xf32>
    %122 = arith.subf %112, %118 : vector<16x32xf32>
    %cst_42 = arith.constant 9.99999974E-6 : f32
    %123 = vector.broadcast %cst_42 : f32 to vector<16x32xf32>
    %124 = arith.addf %121, %123 : vector<16x32xf32>
    %125 = math.rsqrt %124 : vector<16x32xf32>
    %126 = arith.mulf %122, %125 : vector<16x32xf32>
    %127 = vector.broadcast %113 : vector<1x32xf32> to vector<16x32xf32>
    %128 = arith.mulf %126, %127 : vector<16x32xf32>
    %129 = vector.broadcast %114 : vector<1x32xf32> to vector<16x32xf32>
    %130 = arith.addf %128, %129 : vector<16x32xf32>
    %131 = arith.truncf %130 : vector<16x32xf32> to vector<16x32xbf16>
    %c0_43 = arith.constant 0 : index
    %c0_44 = arith.constant 0 : index
    %132 = vector.load %arg15[%c0_43, %c0_44] : memref<32x32xbf16, #tpu.memory_space<vmem>>, vector<32x32xbf16>
    %cst_45 = arith.constant dense<0.000000e+00> : vector<16x32xf32>
    %133 = tpu.matmul %131, %132, %cst_45 {dimension_numbers = #tpu.dot_dimension_numbers<[1], [0], [0], [1], [0, 0, 1, 1], [], []>} : vector<16x32xbf16>, vector<32x32xbf16>, vector<16x32xf32> -> vector<16x32xf32>
    %c0_46 = arith.constant 0 : index
    %c0_47 = arith.constant 0 : index
    %134 = vector.load %arg16[%c0_46, %c0_47] : memref<1x32xf32, #tpu.memory_space<vmem>>, vector<1x32xf32>
    %135 = vector.broadcast %134 : vector<1x32xf32> to vector<16x32xf32>
    %136 = arith.addf %133, %135 : vector<16x32xf32>
    %137 = arith.truncf %136 : vector<16x32xf32> to vector<16x32xbf16>
    %c0_48 = arith.constant 0 : index
    %c0_49 = arith.constant 0 : index
    %138 = vector.load %arg17[%c0_48, %c0_49] : memref<32x256xbf16, #tpu.memory_space<vmem>>, vector<32x256xbf16>
    %cst_50 = arith.constant dense<0.000000e+00> : vector<16x256xf32>
    %139 = tpu.matmul %137, %138, %cst_50 {dimension_numbers = #tpu.dot_dimension_numbers<[1], [0], [0], [1], [0, 0, 1, 1], [], []>} : vector<16x32xbf16>, vector<32x256xbf16>, vector<16x256xf32> -> vector<16x256xf32>
    %140 = vector.extract_strided_slice %139 {offsets = [0, 0], sizes = [16, 64], strides = [1, 1]} : vector<16x256xf32> to vector<16x64xf32>
    %cst_51 = arith.constant dense<0xFF800000> : vector<16xf32>
    %141 = vector.multi_reduction <maximumf>, %140, %cst_51 [1] : vector<16x64xf32> to vector<16xf32>
    %142 = vector.shape_cast %141 : vector<16xf32> to vector<16x1xf32>
    %143 = vector.broadcast %142 : vector<16x1xf32> to vector<16x64xf32>
    %144 = arith.subf %140, %143 : vector<16x64xf32>
    %145 = math.exp %144 : vector<16x64xf32>
    %cst_52 = arith.constant dense<0.000000e+00> : vector<16xf32>
    %146 = vector.multi_reduction <add>, %145, %cst_52 [1] : vector<16x64xf32> to vector<16xf32>
    %147 = vector.shape_cast %146 : vector<16xf32> to vector<16x1xf32>
    %148 = tpu.reciprocal %147 {approx = true} : vector<16x1xf32> -> vector<16x1xf32>
    %149 = vector.broadcast %148 : vector<16x1xf32> to vector<16x64xf32>
    %150 = arith.mulf %145, %149 : vector<16x64xf32>
    %151 = vector.extract_strided_slice %139 {offsets = [0, 64], sizes = [16, 64], strides = [1, 1]} : vector<16x256xf32> to vector<16x64xf32>
    %cst_53 = arith.constant dense<0xFF800000> : vector<16xf32>
    %152 = vector.multi_reduction <maximumf>, %151, %cst_53 [1] : vector<16x64xf32> to vector<16xf32>
    %153 = vector.shape_cast %152 : vector<16xf32> to vector<16x1xf32>
    %154 = vector.broadcast %153 : vector<16x1xf32> to vector<16x64xf32>
    %155 = arith.subf %151, %154 : vector<16x64xf32>
    %156 = math.exp %155 : vector<16x64xf32>
    %cst_54 = arith.constant dense<0.000000e+00> : vector<16xf32>
    %157 = vector.multi_reduction <add>, %156, %cst_54 [1] : vector<16x64xf32> to vector<16xf32>
    %158 = vector.shape_cast %157 : vector<16xf32> to vector<16x1xf32>
    %159 = tpu.reciprocal %158 {approx = true} : vector<16x1xf32> -> vector<16x1xf32>
    %160 = vector.broadcast %159 : vector<16x1xf32> to vector<16x64xf32>
    %161 = arith.mulf %156, %160 : vector<16x64xf32>
    %162 = vector.extract_strided_slice %139 {offsets = [0, 128], sizes = [16, 64], strides = [1, 1]} : vector<16x256xf32> to vector<16x64xf32>
    %cst_55 = arith.constant dense<0xFF800000> : vector<16xf32>
    %163 = vector.multi_reduction <maximumf>, %162, %cst_55 [1] : vector<16x64xf32> to vector<16xf32>
    %164 = vector.shape_cast %163 : vector<16xf32> to vector<16x1xf32>
    %165 = vector.broadcast %164 : vector<16x1xf32> to vector<16x64xf32>
    %166 = arith.subf %162, %165 : vector<16x64xf32>
    %167 = math.exp %166 : vector<16x64xf32>
    %cst_56 = arith.constant dense<0.000000e+00> : vector<16xf32>
    %168 = vector.multi_reduction <add>, %167, %cst_56 [1] : vector<16x64xf32> to vector<16xf32>
    %169 = vector.shape_cast %168 : vector<16xf32> to vector<16x1xf32>
    %170 = tpu.reciprocal %169 {approx = true} : vector<16x1xf32> -> vector<16x1xf32>
    %171 = vector.broadcast %170 : vector<16x1xf32> to vector<16x64xf32>
    %172 = arith.mulf %167, %171 : vector<16x64xf32>
    %173 = vector.extract_strided_slice %139 {offsets = [0, 192], sizes = [16, 64], strides = [1, 1]} : vector<16x256xf32> to vector<16x64xf32>
    %cst_57 = arith.constant dense<0xFF800000> : vector<16xf32>
    %174 = vector.multi_reduction <maximumf>, %173, %cst_57 [1] : vector<16x64xf32> to vector<16xf32>
    %175 = vector.shape_cast %174 : vector<16xf32> to vector<16x1xf32>
    %176 = vector.broadcast %175 : vector<16x1xf32> to vector<16x64xf32>
    %177 = arith.subf %173, %176 : vector<16x64xf32>
    %178 = math.exp %177 : vector<16x64xf32>
    %cst_58 = arith.constant dense<0.000000e+00> : vector<16xf32>
    %179 = vector.multi_reduction <add>, %178, %cst_58 [1] : vector<16x64xf32> to vector<16xf32>
    %180 = vector.shape_cast %179 : vector<16xf32> to vector<16x1xf32>
    %181 = tpu.reciprocal %180 {approx = true} : vector<16x1xf32> -> vector<16x1xf32>
    %182 = vector.broadcast %181 : vector<16x1xf32> to vector<16x64xf32>
    %183 = arith.mulf %178, %182 : vector<16x64xf32>
    %184 = tpu.concatenate %150, %161, %172, %183 in 1 : vector<16x64xf32>, vector<16x64xf32>, vector<16x64xf32>, vector<16x64xf32> -> vector<16x256xf32>
    %185 = arith.truncf %184 : vector<16x256xf32> to vector<16x256xbf16>
    %c0_59 = arith.constant 0 : index
    %c0_60 = arith.constant 0 : index
    %186 = vector.load %arg18[%c0_59, %c0_60] : memref<256x32xbf16, #tpu.memory_space<vmem>>, vector<256x32xbf16>
    %cst_61 = arith.constant dense<0.000000e+00> : vector<16x32xf32>
    %187 = tpu.matmul %185, %186, %cst_61 {dimension_numbers = #tpu.dot_dimension_numbers<[1], [0], [0], [1], [0, 0, 1, 1], [], []>} : vector<16x256xbf16>, vector<256x32xbf16>, vector<16x32xf32> -> vector<16x32xf32>
    %188 = arith.addf %112, %187 : vector<16x32xf32>
    %c0_62 = arith.constant 0 : index
    %c0_63 = arith.constant 0 : index
    %189 = vector.load %arg19[%c0_62, %c0_63] : memref<16x32xf32, #tpu.memory_space<vmem>>, vector<16x32xf32>
    tpu.vector_store %arg19[%c0_62, %c0_63], %188 {strides = array<i32>} : memref<16x32xf32, #tpu.memory_space<vmem>>, vector<16x32xf32>,
    return
  }
}

</mosaic_0001>

<llo_original>
// kernel: tpu_custom_call.1
$region0: #{tpu_custom_call.1}
  #allocation0 [shape = 'u32[]', space=smem, size = 0x4, offset = 0x4, fixed_abs, tag = 'smem constant byte address 0x4 - core index']
  #allocation1 [shape = 'u32[72,128]{1,0:T(1,128)}', space=vmem, size = 0x9000, scoped, tag = 'internal scratch']
  %s0 = inlined_call_operand.vmem [shape: f32[16,32], index: 0, kind: input, shape index: {}]
  %s1 = inlined_call_operand.vmem [shape: f32[32,32], index: 1, kind: input, shape index: {}]
  %s2 = inlined_call_operand.vmem [shape: f32[1,32], index: 2, kind: input, shape index: {}]
  %s3 = inlined_call_operand.vmem [shape: f32[1,32], index: 3, kind: input, shape index: {}]
  %s4 = inlined_call_operand.vmem [shape: f32[1,32], index: 4, kind: input, shape index: {}]
  %s5 = inlined_call_operand.vmem [shape: f32[1,32], index: 5, kind: input, shape index: {}]
  %s6 = inlined_call_operand.vmem [shape: bf16[32,32], index: 6, kind: input, shape index: {}]
  %s7 = inlined_call_operand.vmem [shape: bf16[32,32], index: 7, kind: input, shape index: {}]
  %s8 = inlined_call_operand.vmem [shape: bf16[32,32], index: 8, kind: input, shape index: {}]
  %s9 = inlined_call_operand.vmem [shape: f32[1,32], index: 9, kind: input, shape index: {}]
  %s10 = inlined_call_operand.vmem [shape: f32[1,32], index: 10, kind: input, shape index: {}]
  %s11 = inlined_call_operand.vmem [shape: f32[1,32], index: 11, kind: input, shape index: {}]
  %s12 = inlined_call_operand.vmem [shape: bf16[32,32], index: 12, kind: input, shape index: {}]
  %s13 = inlined_call_operand.vmem [shape: f32[1,32], index: 13, kind: input, shape index: {}]
  %s14 = inlined_call_operand.vmem [shape: f32[8,1,1], index: 14, kind: input, shape index: {}]
  %s15 = inlined_call_operand.vmem [shape: bf16[32,32], index: 15, kind: input, shape index: {}]
  %s16 = inlined_call_operand.vmem [shape: f32[1,32], index: 16, kind: input, shape index: {}]
  %s17 = inlined_call_operand.vmem [shape: bf16[32,256], index: 17, kind: input, shape index: {}]
  %s18 = inlined_call_operand.vmem [shape: bf16[256,32], index: 18, kind: input, shape index: {}]
  %s19 = inlined_call_operand.hbm [shape: f32[16,32], index: 19, kind: output, shape index: {}]
  %s20 = sld [smem:[#allocation0]]
  $region86: #{tpu_custom_call.1} parent=0
    _
  %s22 = ssub.s32 1, %s20
  %s23 = scalar_select 0, %s22, %s20
  $region1: #{tpu_custom_call.1} parent=0
    #allocation2 [shape = 'u8[8192]{0}', space=vmem, size = 0x2000, scoped, tag = 'output window, operand 0, single buffered']
    #allocation3 [shape = 's32[1]{0}', space=sflag, size = 0x4, scoped, tag = 'scoped memory for tpu_custom_call.1']
    %24 = vsyncpa [#allocation3], 0
    // Predicated region
    $region2: #{tpu_custom_call.1} parent=1 // pred_check
      _
    $region3: #{tpu_custom_call.1} parent=1 // pred_check_branch
      %26 = sbr.rel (0) target = $region5
    $region4: #{tpu_custom_call.1} parent=1 // pred_region
      _
    $region5: #{tpu_custom_call.1} parent=1 // pred_fallthru
      _
    // Predicated region
    $region6: #{tpu_custom_call.1} parent=1 // pred_check
      _
    $region7: #{tpu_custom_call.1} parent=1 // pred_check_branch
      %28 = sbr.rel (0) target = $region9
    $region8: #{tpu_custom_call.1} parent=1 // pred_region
      _
    $region9: #{tpu_custom_call.1} parent=1 // pred_fallthru
      _
    // Predicated region
    $region10: #{tpu_custom_call.1} parent=1 // pred_check
      _
    $region11: #{tpu_custom_call.1} parent=1 // pred_check_branch
      %30 = sbr.rel (0) target = $region13
    $region12: #{tpu_custom_call.1} parent=1 // pred_region
      _
    $region13: #{tpu_custom_call.1} parent=1 // pred_fallthru
      _
    // Predicated region
    $region14: #{tpu_custom_call.1} parent=1 // pred_check
      _
    $region15: #{tpu_custom_call.1} parent=1 // pred_check_branch
      %32 = sbr.rel (0) target = $region17
    $region16: #{tpu_custom_call.1} parent=1 // pred_region
      _
    $region17: #{tpu_custom_call.1} parent=1 // pred_fallthru
      _
    // Predicated region
    $region18: #{tpu_custom_call.1} parent=1 // pred_check
      _
    $region19: #{tpu_custom_call.1} parent=1 // pred_check_branch
      %34 = sbr.rel (0) target = $region21
    $region20: #{tpu_custom_call.1} parent=1 // pred_region
      _
    $region21: #{tpu_custom_call.1} parent=1 // pred_fallthru
      _
    // Predicated region
    $region22: #{tpu_custom_call.1} parent=1 // pred_check
      _
    $region23: #{tpu_custom_call.1} parent=1 // pred_check_branch
      %36 = sbr.rel (0) target = $region25
    $region24: #{tpu_custom_call.1} parent=1 // pred_region
      _
    $region25: #{tpu_custom_call.1} parent=1 // pred_fallthru
      _
    // Predicated region
    $region26: #{tpu_custom_call.1} parent=1 // pred_check
      _
    $region27: #{tpu_custom_call.1} parent=1 // pred_check_branch
      %38 = sbr.rel (0) target = $region29
    $region28: #{tpu_custom_call.1} parent=1 // pred_region
      _
    $region29: #{tpu_custom_call.1} parent=1 // pred_fallthru
      _
    // Predicated region
    $region30: #{tpu_custom_call.1} parent=1 // pred_check
      _
    $region31: #{tpu_custom_call.1} parent=1 // pred_check_branch
      %40 = sbr.rel (0) target = $region33
    $region32: #{tpu_custom_call.1} parent=1 // pred_region
      _
    $region33: #{tpu_custom_call.1} parent=1 // pred_fallthru
      _
    // Predicated region
    $region34: #{tpu_custom_call.1} parent=1 // pred_check
      _
    $region35: #{tpu_custom_call.1} parent=1 // pred_check_branch
      %42 = sbr.rel (0) target = $region37
    $region36: #{tpu_custom_call.1} parent=1 // pred_region
      _
    $region37: #{tpu_custom_call.1} parent=1 // pred_fallthru
      _
    // Predicated region
    $region38: #{tpu_custom_call.1} parent=1 // pred_check
      _
    $region39: #{tpu_custom_call.1} parent=1 // pred_check_branch
      %44 = sbr.rel (0) target = $region41
    $region40: #{tpu_custom_call.1} parent=1 // pred_region
      _
    $region41: #{tpu_custom_call.1} parent=1 // pred_fallthru
      _
    // Predicated region
    $region42: #{tpu_custom_call.1} parent=1 // pred_check
      _
    $region43: #{tpu_custom_call.1} parent=1 // pred_check_branch
      %46 = sbr.rel (0) target = $region45
    $region44: #{tpu_custom_call.1} parent=1 // pred_region
      _
    $region45: #{tpu_custom_call.1} parent=1 // pred_fallthru
      _
    // Predicated region
    $region46: #{tpu_custom_call.1} parent=1 // pred_check
      _
    $region47: #{tpu_custom_call.1} parent=1 // pred_check_branch
      %48 = sbr.rel (0) target = $region49
    $region48: #{tpu_custom_call.1} parent=1 // pred_region
      _
    $region49: #{tpu_custom_call.1} parent=1 // pred_fallthru
      _
    // Predicated region
    $region50: #{tpu_custom_call.1} parent=1 // pred_check
      _
    $region51: #{tpu_custom_call.1} parent=1 // pred_check_branch
      %50 = sbr.rel (0) target = $region53
    $region52: #{tpu_custom_call.1} parent=1 // pred_region
      _
    $region53: #{tpu_custom_call.1} parent=1 // pred_fallthru
      _
    // Predicated region
    $region54: #{tpu_custom_call.1} parent=1 // pred_check
      _
    $region55: #{tpu_custom_call.1} parent=1 // pred_check_branch
      %52 = sbr.rel (0) target = $region57
    $region56: #{tpu_custom_call.1} parent=1 // pred_region
      _
    $region57: #{tpu_custom_call.1} parent=1 // pred_fallthru
      _
    // Predicated region
    $region58: #{tpu_custom_call.1} parent=1 // pred_check
      _
    $region59: #{tpu_custom_call.1} parent=1 // pred_check_branch
      %54 = sbr.rel (0) target = $region61
    $region60: #{tpu_custom_call.1} parent=1 // pred_region
      _
    $region61: #{tpu_custom_call.1} parent=1 // pred_fallthru
      _
    // Predicated region
    $region62: #{tpu_custom_call.1} parent=1 // pred_check
      _
    $region63: #{tpu_custom_call.1} parent=1 // pred_check_branch
      %56 = sbr.rel (0) target = $region65
    $region64: #{tpu_custom_call.1} parent=1 // pred_region
      _
    $region65: #{tpu_custom_call.1} parent=1 // pred_fallthru
      _
    // Predicated region
    $region66: #{tpu_custom_call.1} parent=1 // pred_check
      _
    $region67: #{tpu_custom_call.1} parent=1 // pred_check_branch
      %58 = sbr.rel (0) target = $region69
    $region68: #{tpu_custom_call.1} parent=1 // pred_region
      _
    $region69: #{tpu_custom_call.1} parent=1 // pred_fallthru
      _
    // Predicated region
    $region70: #{tpu_custom_call.1} parent=1 // pred_check
      _
    $region71: #{tpu_custom_call.1} parent=1 // pred_check_branch
      %60 = sbr.rel (0) target = $region73
    $region72: #{tpu_custom_call.1} parent=1 // pred_region
      _
    $region73: #{tpu_custom_call.1} parent=1 // pred_fallthru
      _
    // Predicated region
    $region74: #{tpu_custom_call.1} parent=1 // pred_check
      _
    $region75: #{tpu_custom_call.1} parent=1 // pred_check_branch
      %62 = sbr.rel (0) target = $region77
    $region76: #{tpu_custom_call.1} parent=1 // pred_region
      _
    $region77: #{tpu_custom_call.1} parent=1 // pred_fallthru
      _
    %v64 = vld [vmem:[%s0] sm:$0xff]
    %v65 = vld [vmem:[%s0 + $0x8] sm:$0xff]
    %v66 = vld [vmem:[%s1] sm:$0xff]
    %v67 = vld [vmem:[%s1 + $0x8] sm:$0xff]
    %v68 = vld [vmem:[%s1 + $0x10] sm:$0xff]
    %v69 = vld [vmem:[%s1 + $0x18] sm:$0xff]
    %v70 = vld [vmem:[%s2] sm:$0x1]
    %v71 = vld [vmem:[%s3] sm:$0x1]
    %v72 = vmul.f32 %v64, %v64
    %v73 = vmul.f32 %v65, %v65
    %vm74 = vcmask 261120
    %v76 = vsel %vm74, %v64, 0
    %v79 = vsel %vm74, %v65, 0
    %v82 = vsel %vm74, %v72, 0
    %v85 = vsel %vm74, %v73, 0
    %87 = vmatpush.msra.mxu0 0.0
    %88 = vmatpush.msra.mxu0 0.0
    %89 = vmatpush.msra.mxu0 0.0
    %90 = vmatpush.msra.mxu0 0.0
    %91 = vmatpush.msra.mxu0 0.0
    %92 = vmatpush.msra.mxu0 0.0
    %93 = vmatpush.msra.mxu0 0.0
    %94 = vmatpush.msra.mxu0 0.0
    %95 = vmatpush.msra.mxu0 0.0
    %96 = vmatpush.msra.mxu0 0.0
    %97 = vmatpush.msra.mxu0 0.0
    %98 = vmatpush.msra.mxu0 0.0
    %99 = vmatpush.msra.mxu0 %v69
    %100 = vmatpush.msra.mxu0 %v68
    %101 = vmatpush.msra.mxu0 %v67
    %102 = vmatpush.msra.mxu0 %v66
    %103 = vmatmul.f32.gmra.mxu0 %v76
    %v104 = vpop.f32.mrf.mxu0
    %v105 = vadd.f32 0.0, %v104
    %106 = vmatmul.f32.gmra.mxu0 %v79
    %v107 = vpop.f32.mrf.mxu0
    %v108 = vadd.f32 0.0, %v107
    %109 = vmatmul.f32.gmra.mxu0 %v82
    %v110 = vpop.f32.mrf.mxu0
    %v111 = vadd.f32 0.0, %v110
    %112 = vmatmul.f32.gmra.mxu0 %v85
    %v113 = vpop.f32.mrf.mxu0
    %v114 = vadd.f32 0.0, %v113
    %115 = vdwg.mxu0
    %v116 = vmul.f32 %v105, %v105
    %v117 = vmul.f32 %v108, %v108
    %v118 = vsub.f32 %v111, %v116
    %v119 = vsub.f32 %v114, %v117
    %v120 = vsub.f32 %v64, %v105
    %v121 = vsub.f32 %v65, %v108
    %v122 = vadd.f32 %v118, 1e-05
    %v123 = vadd.f32 %v119, 1e-05
    %v124 = vrsqrt.pop %v122
    %v125 = vmul.f32 %v124, %v122
    %v126 = vmul.f32 %v125, %v124
    %v127 = vmul.f32 0.5, %v126
    %v128 = vsub.f32 1.5, %v127
    %v129 = vmul.f32 %v124, %v128
    %vm130 = vweird.f32 %v122
    %vm131 = vweird.f32 %v124
    %vm132 = vmor %vm130, %vm131
    %v133 = vsel %vm132, %v124, %v129
    %v134 = vrsqrt.pop %v123
    %v135 = vmul.f32 %v134, %v123
    %v136 = vmul.f32 %v135, %v134
    %v137 = vmul.f32 0.5, %v136
    %v138 = vsub.f32 1.5, %v137
    %v139 = vmul.f32 %v134, %v138
    %vm140 = vweird.f32 %v123
    %vm141 = vweird.f32 %v134
    %vm142 = vmor %vm140, %vm141
    %v143 = vsel %vm142, %v134, %v139
    %v144 = vmul.f32 %v120, %v133
    %v145 = vmul.f32 %v121, %v143
    %v147 = vperm.slane %v70, 0
    %v149 = vmul.f32 %v144, %v147
    %v150 = vmul.f32 %v145, %v147
    %v152 = vperm.slane %v71, 0
    %v154 = vadd.f32 %v149, %v152
    %v155 = vadd.f32 %v150, %v152
    %v156 = vpack.c.bf16 %v155, %v154
    %v157 = vld [vmem:[%s6] sm:$0xf]
    %v158 = vld [vmem:[%s6 + $0x4] sm:$0xf]
    %v159 = vld [vmem:[%s6 + $0x8] sm:$0xf]
    %v160 = vld [vmem:[%s6 + $0xc] sm:$0xf]
    %v161 = vld [vmem:[%s9] sm:$0x1]
    %v163 = vperm.slane %v161, 0
    %v169 = vunpack.c.l.b16 %v157
    %v170 = vunpack.c.l.b16 %v158
    %v171 = vunpack.c.l.b16 %v159
    %v172 = vunpack.c.l.b16 %v160
    %v173 = vpack.c.b16 %v170, %v169
    %v174 = vpack.c.b16 %v172, %v171
    %v178 = vsel %vm74, %v156, 0
    %180 = vmatpush.bf16.msra.mxu0 0
    %181 = vmatpush.bf16.msra.mxu0 0
    %182 = vmatpush.bf16.msra.mxu0 0
    %183 = vmatpush.bf16.msra.mxu0 0
    %184 = vmatpush.bf16.msra.mxu0 0
    %185 = vmatpush.bf16.msra.mxu0 0
    %186 = vmatpush.bf16.msra.mxu0 %v174
    %187 = vmatpush.bf16.msra.mxu0 %v173
    %188 = vmatmul.bf16.gmra.mxu0 %v178
    %v189 = vpop.f32.mrf.mxu0
    %v190 = vadd.f32 %v163, %v189
    %v191 = vpop.f32.mrf.mxu0
    %v192 = vadd.f32 %v163, %v191
    %193 = vdwg.mxu0
    %v194 = vld [vmem:[%s7] sm:$0xf]
    %v195 = vld [vmem:[%s7 + $0x4] sm:$0xf]
    %v196 = vld [vmem:[%s7 + $0x8] sm:$0xf]
    %v197 = vld [vmem:[%s7 + $0xc] sm:$0xf]
    %v198 = vld [vmem:[%s10] sm:$0x1]
    %v200 = vperm.slane %v198, 0
    %v206 = vunpack.c.l.b16 %v194
    %v207 = vunpack.c.l.b16 %v195
    %v208 = vunpack.c.l.b16 %v196
    %v209 = vunpack.c.l.b16 %v197
    %v210 = vpack.c.b16 %v207, %v206
    %v211 = vpack.c.b16 %v209, %v208
    %214 = vmatpush.bf16.msra.mxu0 0
    %215 = vmatpush.bf16.msra.mxu0 0
    %216 = vmatpush.bf16.msra.mxu0 0
    %217 = vmatpush.bf16.msra.mxu0 0
    %218 = vmatpush.bf16.msra.mxu0 0
    %219 = vmatpush.bf16.msra.mxu0 0
    %220 = vmatpush.bf16.msra.mxu0 %v211
    %221 = vmatpush.bf16.msra.mxu0 %v210
    %222 = vmatmul.bf16.gmra.mxu0 %v178
    %v223 = vpop.f32.mrf.mxu0
    %v224 = vadd.f32 %v200, %v223
    %v225 = vpop.f32.mrf.mxu0
    %v226 = vadd.f32 %v200, %v225
    %227 = vdwg.mxu0
    %v228 = vld [vmem:[%s8] sm:$0xf]
    %v229 = vld [vmem:[%s8 + $0x4] sm:$0xf]
    %v230 = vld [vmem:[%s8 + $0x8] sm:$0xf]
    %v231 = vld [vmem:[%s8 + $0xc] sm:$0xf]
    %v232 = vld [vmem:[%s11] sm:$0x1]
    %v234 = vperm.slane %v232, 0
    %v240 = vunpack.c.l.b16 %v228
    %v241 = vunpack.c.l.b16 %v229
    %v242 = vunpack.c.l.b16 %v230
    %v243 = vunpack.c.l.b16 %v231
    %v244 = vpack.c.b16 %v241, %v240
    %v245 = vpack.c.b16 %v243, %v242
    %248 = vmatpush.bf16.msra.mxu0 0
    %249 = vmatpush.bf16.msra.mxu0 0
    %250 = vmatpush.bf16.msra.mxu0 0
    %251 = vmatpush.bf16.msra.mxu0 0
    %252 = vmatpush.bf16.msra.mxu0 0
    %253 = vmatpush.bf16.msra.mxu0 0
    %254 = vmatpush.bf16.msra.mxu0 %v245
    %255 = vmatpush.bf16.msra.mxu0 %v244
    %256 = vmatmul.bf16.gmra.mxu0 %v178
    %v257 = vpop.f32.mrf.mxu0
    %v258 = vadd.f32 %v234, %v257
    %v259 = vpop.f32.mrf.mxu0
    %v260 = vadd.f32 %v234, %v259
    %261 = vdwg.mxu0
    %264 = vrot.lane.b32.xlu0 %v190, 120
    %v265 = vpop.permute.xlu0 %264
    %266 = vrot.lane.b32.xlu0 %v192, 120
    %v267 = vpop.permute.xlu0 %266
    %270 = vrot.lane.b32.xlu0 %v190, 112
    %v271 = vpop.permute.xlu0 %270
    %272 = vrot.lane.b32.xlu0 %v192, 112
    %v273 = vpop.permute.xlu0 %272
    %276 = vrot.lane.b32.xlu0 %v190, 104
    %v277 = vpop.permute.xlu0 %276
    %278 = vrot.lane.b32.xlu0 %v192, 104
    %v279 = vpop.permute.xlu0 %278
    %v282 = vpack.c.bf16 %v190, %v190
    %v283 = vpack.c.bf16 %v192, %v192
    %v284 = vpack.c.bf16 %v265, %v265
    %v285 = vpack.c.bf16 %v267, %v267
    %v286 = vpack.c.bf16 %v271, %v271
    %v287 = vpack.c.bf16 %v273, %v273
    %v288 = vpack.c.bf16 %v277, %v277
    %v289 = vpack.c.bf16 %v279, %v279
    %292 = vrot.lane.b32.xlu0 %v224, 120
    %v293 = vpop.permute.xlu0 %292
    %294 = vrot.lane.b32.xlu0 %v226, 120
    %v295 = vpop.permute.xlu0 %294
    %298 = vrot.lane.b32.xlu0 %v224, 112
    %v299 = vpop.permute.xlu0 %298
    %300 = vrot.lane.b32.xlu0 %v226, 112
    %v301 = vpop.permute.xlu0 %300
    %304 = vrot.lane.b32.xlu0 %v224, 104
    %v305 = vpop.permute.xlu0 %304
    %306 = vrot.lane.b32.xlu0 %v226, 104
    %v307 = vpop.permute.xlu0 %306
    %v310 = vpack.c.bf16 %v224, %v224
    %v311 = vpack.c.bf16 %v226, %v226
    %v312 = vpack.c.bf16 %v293, %v293
    %v313 = vpack.c.bf16 %v295, %v295
    %v314 = vpack.c.bf16 %v299, %v299
    %v315 = vpack.c.bf16 %v301, %v301
    %v316 = vpack.c.bf16 %v305, %v305
    %v317 = vpack.c.bf16 %v307, %v307
    %320 = vrot.lane.b32.xlu0 %v258, 120
    %v321 = vpop.permute.xlu0 %320
    %322 = vrot.lane.b32.xlu0 %v260, 120
    %v323 = vpop.permute.xlu0 %322
    %326 = vrot.lane.b32.xlu0 %v258, 112
    %v327 = vpop.permute.xlu0 %326
    %328 = vrot.lane.b32.xlu0 %v260, 112
    %v329 = vpop.permute.xlu0 %328
    %332 = vrot.lane.b32.xlu0 %v258, 104
    %v333 = vpop.permute.xlu0 %332
    %334 = vrot.lane.b32.xlu0 %v260, 104
    %v335 = vpop.permute.xlu0 %334
    %v338 = vpack.c.bf16 %v258, %v258
    %v339 = vpack.c.bf16 %v260, %v260
    %v340 = vpack.c.bf16 %v321, %v321
    %v341 = vpack.c.bf16 %v323, %v323
    %v342 = vpack.c.bf16 %v327, %v327
    %v343 = vpack.c.bf16 %v329, %v329
    %v344 = vpack.c.bf16 %v333, %v333
    %v345 = vpack.c.bf16 %v335, %v335
    %vm346 = vcmask 64512
    %v348 = vsel %vm346, %v282, 0
    %v351 = vsel %vm346, %v310, 0
    %353 = vmatpush.bf16.xpose.msra.mxu0 0
    %354 = vmatpush.bf16.xpose.msra.mxu0 0
    %355 = vmatpush.bf16.xpose.msra.mxu0 0
    %356 = vmatpush.bf16.xpose.msra.mxu0 0
    %357 = vmatpush.bf16.xpose.msra.mxu0 0
    %358 = vmatpush.bf16.xpose.msra.mxu0 0
    %359 = vmatpush.bf16.xpose.msra.mxu0 0
    %360 = vmatpush.bf16.xpose.msra.mxu0 %v351
    %361 = vmatmul.bf16.gmra.mxu0 %v348
    %v362 = vpop.f32.mrf.mxu0
    %v363 = vadd.f32 0.0, %v362
    %v364 = vpop.f32.mrf.mxu0
    %365 = vdwg.mxu0
    %v367 = vsel %vm346, %v283, 0
    %v370 = vsel %vm346, %v311, 0
    %372 = vmatpush.bf16.xpose.msra.mxu0 0
    %373 = vmatpush.bf16.xpose.msra.mxu0 0
    %374 = vmatpush.bf16.xpose.msra.mxu0 0
    %375 = vmatpush.bf16.xpose.msra.mxu0 0
    %376 = vmatpush.bf16.xpose.msra.mxu0 0
    %377 = vmatpush.bf16.xpose.msra.mxu0 0
    %378 = vmatpush.bf16.xpose.msra.mxu0 0
    %379 = vmatpush.bf16.xpose.msra.mxu0 %v370
    %380 = vmatmul.bf16.gmra.mxu0 %v367
    %v381 = vpop.f32.mrf.mxu0
    %v382 = vadd.f32 0.0, %v381
    %v383 = vpop.f32.mrf.mxu0
    %384 = vdwg.mxu0
    %v386 = vsel %vm346, %v284, 0
    %v389 = vsel %vm346, %v312, 0
    %391 = vmatpush.bf16.xpose.msra.mxu0 0
    %392 = vmatpush.bf16.xpose.msra.mxu0 0
    %393 = vmatpush.bf16.xpose.msra.mxu0 0
    %394 = vmatpush.bf16.xpose.msra.mxu0 0
    %395 = vmatpush.bf16.xpose.msra.mxu0 0
    %396 = vmatpush.bf16.xpose.msra.mxu0 0
    %397 = vmatpush.bf16.xpose.msra.mxu0 0
    %398 = vmatpush.bf16.xpose.msra.mxu0 %v389
    %399 = vmatmul.bf16.gmra.mxu0 %v386
    %v400 = vpop.f32.mrf.mxu0
    %v401 = vadd.f32 0.0, %v400
    %v402 = vpop.f32.mrf.mxu0
    %403 = vdwg.mxu0
    %v405 = vsel %vm346, %v285, 0
    %v408 = vsel %vm346, %v313, 0
    %410 = vmatpush.bf16.xpose.msra.mxu0 0
    %411 = vmatpush.bf16.xpose.msra.mxu0 0
    %412 = vmatpush.bf16.xpose.msra.mxu0 0
    %413 = vmatpush.bf16.xpose.msra.mxu0 0
    %414 = vmatpush.bf16.xpose.msra.mxu0 0
    %415 = vmatpush.bf16.xpose.msra.mxu0 0
    %416 = vmatpush.bf16.xpose.msra.mxu0 0
    %417 = vmatpush.bf16.xpose.msra.mxu0 %v408
    %418 = vmatmul.bf16.gmra.mxu0 %v405
    %v419 = vpop.f32.mrf.mxu0
    %v420 = vadd.f32 0.0, %v419
    %v421 = vpop.f32.mrf.mxu0
    %422 = vdwg.mxu0
    %v424 = vsel %vm346, %v286, 0
    %v427 = vsel %vm346, %v314, 0
    %429 = vmatpush.bf16.xpose.msra.mxu0 0
    %430 = vmatpush.bf16.xpose.msra.mxu0 0
    %431 = vmatpush.bf16.xpose.msra.mxu0 0
    %432 = vmatpush.bf16.xpose.msra.mxu0 0
    %433 = vmatpush.bf16.xpose.msra.mxu0 0
    %434 = vmatpush.bf16.xpose.msra.mxu0 0
    %435 = vmatpush.bf16.xpose.msra.mxu0 0
    %436 = vmatpush.bf16.xpose.msra.mxu0 %v427
    %437 = vmatmul.bf16.gmra.mxu0 %v424
    %v438 = vpop.f32.mrf.mxu0
    %v439 = vadd.f32 0.0, %v438
    %v440 = vpop.f32.mrf.mxu0
    %441 = vdwg.mxu0
    %v443 = vsel %vm346, %v287, 0
    %v446 = vsel %vm346, %v315, 0
    %448 = vmatpush.bf16.xpose.msra.mxu0 0
    %449 = vmatpush.bf16.xpose.msra.mxu0 0
    %450 = vmatpush.bf16.xpose.msra.mxu0 0
    %451 = vmatpush.bf16.xpose.msra.mxu0 0
    %452 = vmatpush.bf16.xpose.msra.mxu0 0
    %453 = vmatpush.bf16.xpose.msra.mxu0 0
    %454 = vmatpush.bf16.xpose.msra.mxu0 0
    %455 = vmatpush.bf16.xpose.msra.mxu0 %v446
    %456 = vmatmul.bf16.gmra.mxu0 %v443
    %v457 = vpop.f32.mrf.mxu0
    %v458 = vadd.f32 0.0, %v457
    %v459 = vpop.f32.mrf.mxu0
    %460 = vdwg.mxu0
    %v462 = vsel %vm346, %v288, 0
    %v465 = vsel %vm346, %v316, 0
    %467 = vmatpush.bf16.xpose.msra.mxu0 0
    %468 = vmatpush.bf16.xpose.msra.mxu0 0
    %469 = vmatpush.bf16.xpose.msra.mxu0 0
    %470 = vmatpush.bf16.xpose.msra.mxu0 0
    %471 = vmatpush.bf16.xpose.msra.mxu0 0
    %472 = vmatpush.bf16.xpose.msra.mxu0 0
    %473 = vmatpush.bf16.xpose.msra.mxu0 0
    %474 = vmatpush.bf16.xpose.msra.mxu0 %v465
    %475 = vmatmul.bf16.gmra.mxu0 %v462
    %v476 = vpop.f32.mrf.mxu0
    %v477 = vadd.f32 0.0, %v476
    %v478 = vpop.f32.mrf.mxu0
    %479 = vdwg.mxu0
    %v481 = vsel %vm346, %v289, 0
    %v484 = vsel %vm346, %v317, 0
    %486 = vmatpush.bf16.xpose.msra.mxu0 0
    %487 = vmatpush.bf16.xpose.msra.mxu0 0
    %488 = vmatpush.bf16.xpose.msra.mxu0 0
    %489 = vmatpush.bf16.xpose.msra.mxu0 0
    %490 = vmatpush.bf16.xpose.msra.mxu0 0
    %491 = vmatpush.bf16.xpose.msra.mxu0 0
    %492 = vmatpush.bf16.xpose.msra.mxu0 0
    %493 = vmatpush.bf16.xpose.msra.mxu0 %v484
    %494 = vmatmul.bf16.gmra.mxu0 %v481
    %v495 = vpop.f32.mrf.mxu0
    %v496 = vadd.f32 0.0, %v495
    %v497 = vpop.f32.mrf.mxu0
    %498 = vdwg.mxu0
    %v499 = vmul.f32 %v363, 0.35355338
    %v500 = vmul.f32 %v382, 0.35355338
    %v501 = vmul.f32 %v401, 0.35355338
    %v502 = vmul.f32 %v420, 0.35355338
    %v503 = vmul.f32 %v439, 0.35355338
    %v504 = vmul.f32 %v458, 0.35355338
    %v505 = vmul.f32 %v477, 0.35355338
    %v506 = vmul.f32 %v496, 0.35355338
    %v507 = vlaneseq
    %v508 = vshrl.u32 %v507, 7
    %v509 = vlaneseq
    %v510 = vand.u32 %v509, 127
    %v511 = vsub.s32 %v510, %v508
    %v512 = vcvt.s32.f32 %v511
    %v513 = vld [vmem:[%s14] sm:$0x1]
    %v514 = vld [vmem:[%s14 + $0x1] sm:$0x1]
    %v515 = vld [vmem:[%s14 + $0x2] sm:$0x1]
    %v516 = vld [vmem:[%s14 + $0x3] sm:$0x1]
    %v517 = vld [vmem:[%s14 + $0x4] sm:$0x1]
    %v518 = vld [vmem:[%s14 + $0x5] sm:$0x1]
    %v519 = vld [vmem:[%s14 + $0x6] sm:$0x1]
    %v520 = vld [vmem:[%s14 + $0x7] sm:$0x1]
    %v529 = vperm.slane %v513, 0
    %v530 = vperm.slane %v514, 0
    %v531 = vperm.slane %v515, 0
    %v532 = vperm.slane %v516, 0
    %v533 = vperm.slane %v517, 0
    %v534 = vperm.slane %v518, 0
    %v535 = vperm.slane %v519, 0
    %v536 = vperm.slane %v520, 0
    %537 = vset.pattern.permute.xlu0 0
    %538 = vperm.xlu0 %537, %v529
    %v539 = vpop.permute.xlu0 %538
    %541 = vset.pattern.permute.xlu0 0
    %542 = vperm.xlu0 %541, %v530
    %v543 = vpop.permute.xlu0 %542
    %545 = vset.pattern.permute.xlu0 0
    %546 = vperm.xlu0 %545, %v531
    %v547 = vpop.permute.xlu0 %546
    %549 = vset.pattern.permute.xlu0 0
    %550 = vperm.xlu0 %549, %v532
    %v551 = vpop.permute.xlu0 %550
    %553 = vset.pattern.permute.xlu0 0
    %554 = vperm.xlu0 %553, %v533
    %v555 = vpop.permute.xlu0 %554
    %557 = vset.pattern.permute.xlu0 0
    %558 = vperm.xlu0 %557, %v534
    %v559 = vpop.permute.xlu0 %558
    %561 = vset.pattern.permute.xlu0 0
    %562 = vperm.xlu0 %561, %v535
    %v563 = vpop.permute.xlu0 %562
    %565 = vset.pattern.permute.xlu0 0
    %566 = vperm.xlu0 %565, %v536
    %v567 = vpop.permute.xlu0 %566
    %v569 = vmul.f32 %v539, %v512
    %v570 = vmul.f32 %v543, %v512
    %v571 = vmul.f32 %v547, %v512
    %v572 = vmul.f32 %v551, %v512
    %v573 = vmul.f32 %v555, %v512
    %v574 = vmul.f32 %v559, %v512
    %v575 = vmul.f32 %v563, %v512
    %v576 = vmul.f32 %v567, %v512
    %v577 = vadd.f32 %v499, %v569
    %v578 = vadd.f32 %v500, %v570
    %v579 = vadd.f32 %v501, %v571
    %v580 = vadd.f32 %v502, %v572
    %v581 = vadd.f32 %v503, %v573
    %v582 = vadd.f32 %v504, %v574
    %v583 = vadd.f32 %v505, %v575
    %v584 = vadd.f32 %v506, %v576
    %vm585 = vcmp.le.s32.totalorder %v510, %v508
    %v586 = vsel %vm585, 1, 0
    %vm587 = vcmp.eq.s32.totalorder %v586, 1
    %v588 = vsel %vm587, %v577, -1e+30
    %v589 = vsel %vm587, %v578, -1e+30
    %v590 = vsel %vm587, %v579, -1e+30
    %v591 = vsel %vm587, %v580, -1e+30
    %v592 = vsel %vm587, %v581, -1e+30
    %v593 = vsel %vm587, %v582, -1e+30
    %v594 = vsel %vm587, %v583, -1e+30
    %v595 = vsel %vm587, %v584, -1e+30
    %v596 = vsel %vm346, %v588, -inf
    %597 = vmax.xlane.f32.xlu0 %v596
    %v598 = vpop.xlane.xlu0 %597
    %v599 = vsel %vm346, %v589, -inf
    %600 = vmax.xlane.f32.xlu0 %v599
    %v601 = vpop.xlane.xlu0 %600
    %v602 = vsel %vm346, %v590, -inf
    %603 = vmax.xlane.f32.xlu0 %v602
    %v604 = vpop.xlane.xlu0 %603
    %v605 = vsel %vm346, %v591, -inf
    %606 = vmax.xlane.f32.xlu0 %v605
    %v607 = vpop.xlane.xlu0 %606
    %v608 = vsel %vm346, %v592, -inf
    %609 = vmax.xlane.f32.xlu0 %v608
    %v610 = vpop.xlane.xlu0 %609
    %v611 = vsel %vm346, %v593, -inf
    %612 = vmax.xlane.f32.xlu0 %v611
    %v613 = vpop.xlane.xlu0 %612
    %v614 = vsel %vm346, %v594, -inf
    %615 = vmax.xlane.f32.xlu0 %v614
    %v616 = vpop.xlane.xlu0 %615
    %v617 = vsel %vm346, %v595, -inf
    %618 = vmax.xlane.f32.xlu0 %v617
    %v619 = vpop.xlane.xlu0 %618
    %v620 = vsub.f32 %v588, %v598
    %v621 = vsub.f32 %v589, %v601
    %v622 = vsub.f32 %v590, %v604
    %v623 = vsub.f32 %v591, %v607
    %v624 = vsub.f32 %v592, %v610
    %v625 = vsub.f32 %v593, %v613
    %v626 = vsub.f32 %v594, %v616
    %v627 = vsub.f32 %v595, %v619
    %v628 = vmul.f32 %v620, 1.442695
    %v629 = vpow.pop %v628
    %v630 = vmul.f32 %v621, 1.442695
    %v631 = vpow.pop %v630
    %v632 = vmul.f32 %v622, 1.442695
    %v633 = vpow.pop %v632
    %v634 = vmul.f32 %v623, 1.442695
    %v635 = vpow.pop %v634
    %v636 = vmul.f32 %v624, 1.442695
    %v637 = vpow.pop %v636
    %v638 = vmul.f32 %v625, 1.442695
    %v639 = vpow.pop %v638
    %v640 = vmul.f32 %v626, 1.442695
    %v641 = vpow.pop %v640
    %v642 = vmul.f32 %v627, 1.442695
    %v643 = vpow.pop %v642
    %v644 = vsel %vm346, %v629, 0.0
    %645 = vadd.xlane.f32.xlu0 %v644
    %v646 = vpop.xlane.xlu0 %645
    %v647 = vsel %vm346, %v631, 0.0
    %648 = vadd.xlane.f32.xlu0 %v647
    %v649 = vpop.xlane.xlu0 %648
    %v650 = vsel %vm346, %v633, 0.0
    %651 = vadd.xlane.f32.xlu0 %v650
    %v652 = vpop.xlane.xlu0 %651
    %v653 = vsel %vm346, %v635, 0.0
    %654 = vadd.xlane.f32.xlu0 %v653
    %v655 = vpop.xlane.xlu0 %654
    %v656 = vsel %vm346, %v637, 0.0
    %657 = vadd.xlane.f32.xlu0 %v656
    %v658 = vpop.xlane.xlu0 %657
    %v659 = vsel %vm346, %v639, 0.0
    %660 = vadd.xlane.f32.xlu0 %v659
    %v661 = vpop.xlane.xlu0 %660
    %v662 = vsel %vm346, %v641, 0.0
    %663 = vadd.xlane.f32.xlu0 %v662
    %v664 = vpop.xlane.xlu0 %663
    %v665 = vsel %vm346, %v643, 0.0
    %666 = vadd.xlane.f32.xlu0 %v665
    %v667 = vpop.xlane.xlu0 %666
    %v668 = vrcp.pop %v646
    %v669 = vrcp.pop %v649
    %v670 = vrcp.pop %v652
    %v671 = vrcp.pop %v655
    %v672 = vrcp.pop %v658
    %v673 = vrcp.pop %v661
    %v674 = vrcp.pop %v664
    %v675 = vrcp.pop %v667
    %v676 = vmul.f32 %v629, %v668
    %v677 = vmul.f32 %v631, %v669
    %v678 = vmul.f32 %v633, %v670
    %v679 = vmul.f32 %v635, %v671
    %v680 = vmul.f32 %v637, %v672
    %v681 = vmul.f32 %v639, %v673
    %v682 = vmul.f32 %v641, %v674
    %v683 = vmul.f32 %v643, %v675
    %v684 = vpack.c.bf16 %v676, %v676
    %v685 = vpack.c.bf16 %v677, %v677
    %v686 = vpack.c.bf16 %v678, %v678
    %v687 = vpack.c.bf16 %v679, %v679
    %v688 = vpack.c.bf16 %v680, %v680
    %v689 = vpack.c.bf16 %v681, %v681
    %v690 = vpack.c.bf16 %v682, %v682
    %v691 = vpack.c.bf16 %v683, %v683
    %v693 = vsel %vm346, %v684, 0
    %vm695 = vcmask 1043456
    %v697 = vsel %vm695, %v338, 0
    %699 = vmatpush.bf16.msra.mxu0 0
    %700 = vmatpush.bf16.msra.mxu0 0
    %701 = vmatpush.bf16.msra.mxu0 0
    %702 = vmatpush.bf16.msra.mxu0 0
    %703 = vmatpush.bf16.msra.mxu0 0
    %704 = vmatpush.bf16.msra.mxu0 0
    %705 = vmatpush.bf16.msra.mxu0 0
    %706 = vmatpush.bf16.msra.mxu0 %v697
    %707 = vmatmul.bf16.gmra.mxu0 %v693
    %v708 = vpop.f32.mrf.mxu0
    %v709 = vadd.f32 0.0, %v708
    %v710 = vpop.f32.mrf.mxu0
    %711 = vdwg.mxu0
    %v713 = vsel %vm346, %v685, 0
    %v716 = vsel %vm695, %v339, 0
    %718 = vmatpush.bf16.msra.mxu0 0
    %719 = vmatpush.bf16.msra.mxu0 0
    %720 = vmatpush.bf16.msra.mxu0 0
    %721 = vmatpush.bf16.msra.mxu0 0
    %722 = vmatpush.bf16.msra.mxu0 0
    %723 = vmatpush.bf16.msra.mxu0 0
    %724 = vmatpush.bf16.msra.mxu0 0
    %725 = vmatpush.bf16.msra.mxu0 %v716
    %726 = vmatmul.bf16.gmra.mxu0 %v713
    %v727 = vpop.f32.mrf.mxu0
    %v728 = vadd.f32 0.0, %v727
    %v729 = vpop.f32.mrf.mxu0
    %730 = vdwg.mxu0
    %v732 = vsel %vm346, %v686, 0
    %v735 = vsel %vm695, %v340, 0
    %737 = vmatpush.bf16.msra.mxu0 0
    %738 = vmatpush.bf16.msra.mxu0 0
    %739 = vmatpush.bf16.msra.mxu0 0
    %740 = vmatpush.bf16.msra.mxu0 0
    %741 = vmatpush.bf16.msra.mxu0 0
    %742 = vmatpush.bf16.msra.mxu0 0
    %743 = vmatpush.bf16.msra.mxu0 0
    %744 = vmatpush.bf16.msra.mxu0 %v735
    %745 = vmatmul.bf16.gmra.mxu0 %v732
    %v746 = vpop.f32.mrf.mxu0
    %v747 = vadd.f32 0.0, %v746
    %v748 = vpop.f32.mrf.mxu0
    %749 = vdwg.mxu0
    %v751 = vsel %vm346, %v687, 0
    %v754 = vsel %vm695, %v341, 0
    %756 = vmatpush.bf16.msra.mxu0 0
    %757 = vmatpush.bf16.msra.mxu0 0
    %758 = vmatpush.bf16.msra.mxu0 0
    %759 = vmatpush.bf16.msra.mxu0 0
    %760 = vmatpush.bf16.msra.mxu0 0
    %761 = vmatpush.bf16.msra.mxu0 0
    %762 = vmatpush.bf16.msra.mxu0 0
    %763 = vmatpush.bf16.msra.mxu0 %v754
    %764 = vmatmul.bf16.gmra.mxu0 %v751
    %v765 = vpop.f32.mrf.mxu0
    %v766 = vadd.f32 0.0, %v765
    %v767 = vpop.f32.mrf.mxu0
    %768 = vdwg.mxu0
    %v770 = vsel %vm346, %v688, 0
    %v773 = vsel %vm695, %v342, 0
    %775 = vmatpush.bf16.msra.mxu0 0
    %776 = vmatpush.bf16.msra.mxu0 0
    %777 = vmatpush.bf16.msra.mxu0 0
    %778 = vmatpush.bf16.msra.mxu0 0
    %779 = vmatpush.bf16.msra.mxu0 0
    %780 = vmatpush.bf16.msra.mxu0 0
    %781 = vmatpush.bf16.msra.mxu0 0
    %782 = vmatpush.bf16.msra.mxu0 %v773
    %783 = vmatmul.bf16.gmra.mxu0 %v770
    %v784 = vpop.f32.mrf.mxu0
    %v785 = vadd.f32 0.0, %v784
    %v786 = vpop.f32.mrf.mxu0
    %787 = vdwg.mxu0
    %v789 = vsel %vm346, %v689, 0
    %v792 = vsel %vm695, %v343, 0
    %794 = vmatpush.bf16.msra.mxu0 0
    %795 = vmatpush.bf16.msra.mxu0 0
    %796 = vmatpush.bf16.msra.mxu0 0
    %797 = vmatpush.bf16.msra.mxu0 0
    %798 = vmatpush.bf16.msra.mxu0 0
    %799 = vmatpush.bf16.msra.mxu0 0
    %800 = vmatpush.bf16.msra.mxu0 0
    %801 = vmatpush.bf16.msra.mxu0 %v792
    %802 = vmatmul.bf16.gmra.mxu0 %v789
    %v803 = vpop.f32.mrf.mxu0
    %v804 = vadd.f32 0.0, %v803
    %v805 = vpop.f32.mrf.mxu0
    %806 = vdwg.mxu0
    %v808 = vsel %vm346, %v690, 0
    %v811 = vsel %vm695, %v344, 0
    %813 = vmatpush.bf16.msra.mxu0 0
    %814 = vmatpush.bf16.msra.mxu0 0
    %815 = vmatpush.bf16.msra.mxu0 0
    %816 = vmatpush.bf16.msra.mxu0 0
    %817 = vmatpush.bf16.msra.mxu0 0
    %818 = vmatpush.bf16.msra.mxu0 0
    %819 = vmatpush.bf16.msra.mxu0 0
    %820 = vmatpush.bf16.msra.mxu0 %v811
    %821 = vmatmul.bf16.gmra.mxu0 %v808
    %v822 = vpop.f32.mrf.mxu0
    %v823 = vadd.f32 0.0, %v822
    %v824 = vpop.f32.mrf.mxu0
    %825 = vdwg.mxu0
    %v827 = vsel %vm346, %v691, 0
    %v830 = vsel %vm695, %v345, 0
    %832 = vmatpush.bf16.msra.mxu0 0
    %833 = vmatpush.bf16.msra.mxu0 0
    %834 = vmatpush.bf16.msra.mxu0 0
    %835 = vmatpush.bf16.msra.mxu0 0
    %836 = vmatpush.bf16.msra.mxu0 0
    %837 = vmatpush.bf16.msra.mxu0 0
    %838 = vmatpush.bf16.msra.mxu0 0
    %839 = vmatpush.bf16.msra.mxu0 %v830
    %840 = vmatmul.bf16.gmra.mxu0 %v827
    %v841 = vpop.f32.mrf.mxu0
    %v842 = vadd.f32 0.0, %v841
    %v843 = vpop.f32.mrf.mxu0
    %844 = vdwg.mxu0
    %847 = vrot.lane.b32.xlu0 %v747, 8
    %v848 = vpop.permute.xlu0 %847
    %849 = vrot.lane.b32.xlu0 %v766, 8
    %v850 = vpop.permute.xlu0 %849
    %855 = vrot.lane.b32.xlu0 %v785, 16
    %v856 = vpop.permute.xlu0 %855
    %857 = vrot.lane.b32.xlu0 %v804, 16
    %v858 = vpop.permute.xlu0 %857
    %863 = vrot.lane.b32.xlu0 %v823, 24
    %v864 = vpop.permute.xlu0 %863
    %865 = vrot.lane.b32.xlu0 %v842, 24
    %v866 = vpop.permute.xlu0 %865
    %v869 = vsel %vm346, %v709, %v848
    %v870 = vsel %vm346, %v728, %v850
    %vm871 = vcmask 130048
    %v872 = vsel %vm871, %v869, %v856
    %v873 = vsel %vm871, %v870, %v858
    %vm874 = vcmask 195584
    %v875 = vsel %vm874, %v872, %v864
    %v876 = vsel %vm874, %v873, %v866
    %v877 = vpack.c.bf16 %v876, %v875
    %v878 = vld [vmem:[%s12] sm:$0xf]
    %v879 = vld [vmem:[%s12 + $0x4] sm:$0xf]
    %v880 = vld [vmem:[%s12 + $0x8] sm:$0xf]
    %v881 = vld [vmem:[%s12 + $0xc] sm:$0xf]
    %v882 = vld [vmem:[%s13] sm:$0x1]
    %v884 = vperm.slane %v882, 0
    %v890 = vunpack.c.l.b16 %v878
    %v891 = vunpack.c.l.b16 %v879
    %v892 = vunpack.c.l.b16 %v880
    %v893 = vunpack.c.l.b16 %v881
    %v894 = vpack.c.b16 %v891, %v890
    %v895 = vpack.c.b16 %v893, %v892
    %v899 = vsel %vm74, %v877, 0
    %901 = vmatpush.bf16.msra.mxu0 0
    %902 = vmatpush.bf16.msra.mxu0 0
    %903 = vmatpush.bf16.msra.mxu0 0
    %904 = vmatpush.bf16.msra.mxu0 0
    %905 = vmatpush.bf16.msra.mxu0 0
    %906 = vmatpush.bf16.msra.mxu0 0
    %907 = vmatpush.bf16.msra.mxu0 %v895
    %908 = vmatpush.bf16.msra.mxu0 %v894
    %909 = vmatmul.bf16.gmra.mxu0 %v899
    %v910 = vpop.f32.mrf.mxu0
    %v911 = vadd.f32 %v884, %v910
    %v912 = vpop.f32.mrf.mxu0
    %v913 = vadd.f32 %v884, %v912
    %914 = vdwg.mxu0
    %v915 = vadd.f32 %v64, %v911
    %v916 = vadd.f32 %v65, %v913
    %v917 = vld [vmem:[%s4] sm:$0x1]
    %v918 = vld [vmem:[%s5] sm:$0x1]
    %v919 = vmul.f32 %v915, %v915
    %v920 = vmul.f32 %v916, %v916
    %v922 = vsel %vm74, %v915, 0
    %v925 = vsel %vm74, %v916, 0
    %v928 = vsel %vm74, %v919, 0
    %v931 = vsel %vm74, %v920, 0
    %933 = vmatpush.msra.mxu0 0.0
    %934 = vmatpush.msra.mxu0 0.0
    %935 = vmatpush.msra.mxu0 0.0
    %936 = vmatpush.msra.mxu0 0.0
    %937 = vmatpush.msra.mxu0 0.0
    %938 = vmatpush.msra.mxu0 0.0
    %939 = vmatpush.msra.mxu0 0.0
    %940 = vmatpush.msra.mxu0 0.0
    %941 = vmatpush.msra.mxu0 0.0
    %942 = vmatpush.msra.mxu0 0.0
    %943 = vmatpush.msra.mxu0 0.0
    %944 = vmatpush.msra.mxu0 0.0
    %945 = vmatpush.msra.mxu0 %v69
    %946 = vmatpush.msra.mxu0 %v68
    %947 = vmatpush.msra.mxu0 %v67
    %948 = vmatpush.msra.mxu0 %v66
    %949 = vmatmul.f32.gmra.mxu0 %v922
    %v950 = vpop.f32.mrf.mxu0
    %v951 = vadd.f32 0.0, %v950
    %952 = vmatmul.f32.gmra.mxu0 %v925
    %v953 = vpop.f32.mrf.mxu0
    %v954 = vadd.f32 0.0, %v953
    %955 = vmatmul.f32.gmra.mxu0 %v928
    %v956 = vpop.f32.mrf.mxu0
    %v957 = vadd.f32 0.0, %v956
    %958 = vmatmul.f32.gmra.mxu0 %v931
    %v959 = vpop.f32.mrf.mxu0
    %v960 = vadd.f32 0.0, %v959
    %961 = vdwg.mxu0
    %v962 = vmul.f32 %v951, %v951
    %v963 = vmul.f32 %v954, %v954
    %v964 = vsub.f32 %v957, %v962
    %v965 = vsub.f32 %v960, %v963
    %v966 = vsub.f32 %v915, %v951
    %v967 = vsub.f32 %v916, %v954
    %v968 = vadd.f32 %v964, 1e-05
    %v969 = vadd.f32 %v965, 1e-05
    %v970 = vrsqrt.pop %v968
    %v971 = vmul.f32 %v970, %v968
    %v972 = vmul.f32 %v971, %v970
    %v973 = vmul.f32 0.5, %v972
    %v974 = vsub.f32 1.5, %v973
    %v975 = vmul.f32 %v970, %v974
    %vm976 = vweird.f32 %v968
    %vm977 = vweird.f32 %v970
    %vm978 = vmor %vm976, %vm977
    %v979 = vsel %vm978, %v970, %v975
    %v980 = vrsqrt.pop %v969
    %v981 = vmul.f32 %v980, %v969
    %v982 = vmul.f32 %v981, %v980
    %v983 = vmul.f32 0.5, %v982
    %v984 = vsub.f32 1.5, %v983
    %v985 = vmul.f32 %v980, %v984
    %vm986 = vweird.f32 %v969
    %vm987 = vweird.f32 %v980
    %vm988 = vmor %vm986, %vm987
    %v989 = vsel %vm988, %v980, %v985
    %v990 = vmul.f32 %v966, %v979
    %v991 = vmul.f32 %v967, %v989
    %v993 = vperm.slane %v917, 0
    %v995 = vmul.f32 %v990, %v993
    %v996 = vmul.f32 %v991, %v993
    %v998 = vperm.slane %v918, 0
    %v1000 = vadd.f32 %v995, %v998
    %v1001 = vadd.f32 %v996, %v998
    %v1002 = vpack.c.bf16 %v1001, %v1000
    %v1003 = vld [vmem:[%s15] sm:$0xf]
    %v1004 = vld [vmem:[%s15 + $0x4] sm:$0xf]
    %v1005 = vld [vmem:[%s15 + $0x8] sm:$0xf]
    %v1006 = vld [vmem:[%s15 + $0xc] sm:$0xf]
    %v1007 = vld [vmem:[%s16] sm:$0x1]
    %v1009 = vperm.slane %v1007, 0
    %v1015 = vunpack.c.l.b16 %v1003
    %v1016 = vunpack.c.l.b16 %v1004
    %v1017 = vunpack.c.l.b16 %v1005
    %v1018 = vunpack.c.l.b16 %v1006
    %v1019 = vpack.c.b16 %v1016, %v1015
    %v1020 = vpack.c.b16 %v1018, %v1017
    %v1024 = vsel %vm74, %v1002, 0
    %1026 = vmatpush.bf16.msra.mxu0 0
    %1027 = vmatpush.bf16.msra.mxu0 0
    %1028 = vmatpush.bf16.msra.mxu0 0
    %1029 = vmatpush.bf16.msra.mxu0 0
    %1030 = vmatpush.bf16.msra.mxu0 0
    %1031 = vmatpush.bf16.msra.mxu0 0
    %1032 = vmatpush.bf16.msra.mxu0 %v1020
    %1033 = vmatpush.bf16.msra.mxu0 %v1019
    %1034 = vmatmul.bf16.gmra.mxu0 %v1024
    %v1035 = vpop.f32.mrf.mxu0
    %v1036 = vadd.f32 %v1009, %v1035
    %v1037 = vpop.f32.mrf.mxu0
    %v1038 = vadd.f32 %v1009, %v1037
    %1039 = vdwg.mxu0
    %v1040 = vpack.c.bf16 %v1038, %v1036
    %v1041 = vld [vmem:[%s17] sm:$0xff]
    %v1042 = vld [vmem:[%s17 + $0x8] sm:$0xff]
    %v1043 = vld [vmem:[%s17 + $0x10] sm:$0xff]
    %v1044 = vld [vmem:[%s17 + $0x18] sm:$0xff]
    %v1049 = vunpack.c.l.b16 %v1041
    %v1050 = vunpack.c.h.b16 %v1041
    %v1051 = vunpack.c.l.b16 %v1042
    %v1052 = vunpack.c.h.b16 %v1042
    %v1053 = vunpack.c.l.b16 %v1043
    %v1054 = vunpack.c.h.b16 %v1043
    %v1055 = vunpack.c.l.b16 %v1044
    %v1056 = vunpack.c.h.b16 %v1044
    %v1057 = vpack.c.b16 %v1051, %v1049
    %v1058 = vpack.c.b16 %v1052, %v1050
    %v1059 = vpack.c.b16 %v1055, %v1053
    %v1060 = vpack.c.b16 %v1056, %v1054
    %v1066 = vsel %vm74, %v1040, 0
    %1068 = vmatpush.bf16.msra.mxu0 0
    %1069 = vmatpush.bf16.msra.mxu0 0
    %1070 = vmatpush.bf16.msra.mxu0 0
    %1071 = vmatpush.bf16.msra.mxu0 0
    %1072 = vmatpush.bf16.msra.mxu0 0
    %1073 = vmatpush.bf16.msra.mxu0 0
    %1074 = vmatpush.bf16.msra.mxu0 %v1059
    %1075 = vmatpush.bf16.msra.mxu0 %v1057
    %1076 = vmatmul.bf16.gmra.mxu0 %v1066
    %v1077 = vpop.f32.mrf.mxu0
    %v1078 = vadd.f32 0.0, %v1077
    %v1079 = vpop.f32.mrf.mxu0
    %v1080 = vadd.f32 0.0, %v1079
    %1081 = vdwg.mxu0
    %1082 = vmatpush.bf16.msra.mxu0 0
    %1083 = vmatpush.bf16.msra.mxu0 0
    %1084 = vmatpush.bf16.msra.mxu0 0
    %1085 = vmatpush.bf16.msra.mxu0 0
    %1086 = vmatpush.bf16.msra.mxu0 0
    %1087 = vmatpush.bf16.msra.mxu0 0
    %1088 = vmatpush.bf16.msra.mxu0 %v1060
    %1089 = vmatpush.bf16.msra.mxu0 %v1058
    %1090 = vmatmul.bf16.gmra.mxu0 %v1066
    %v1091 = vpop.f32.mrf.mxu0
    %v1092 = vadd.f32 0.0, %v1091
    %v1093 = vpop.f32.mrf.mxu0
    %v1094 = vadd.f32 0.0, %v1093
    %1095 = vdwg.mxu0
    %vm1096 = vcmask 523264
    %v1097 = vsel %vm1096, %v1078, -inf
    %1098 = vmax.xlane.f32.xlu0 %v1097
    %v1099 = vpop.xlane.xlu0 %1098
    %v1100 = vsel %vm1096, %v1080, -inf
    %1101 = vmax.xlane.f32.xlu0 %v1100
    %v1102 = vpop.xlane.xlu0 %1101
    %v1103 = vsub.f32 %v1078, %v1099
    %v1104 = vsub.f32 %v1080, %v1102
    %v1105 = vmul.f32 %v1103, 1.442695
    %v1106 = vpow.pop %v1105
    %v1107 = vmul.f32 %v1104, 1.442695
    %v1108 = vpow.pop %v1107
    %v1109 = vsel %vm1096, %v1106, 0.0
    %1110 = vadd.xlane.f32.xlu0 %v1109
    %v1111 = vpop.xlane.xlu0 %1110
    %v1112 = vsel %vm1096, %v1108, 0.0
    %1113 = vadd.xlane.f32.xlu0 %v1112
    %v1114 = vpop.xlane.xlu0 %1113
    %v1115 = vrcp.pop %v1111
    %v1116 = vrcp.pop %v1114
    %v1117 = vmul.f32 %v1106, %v1115
    %v1118 = vmul.f32 %v1108, %v1116
    %vm1119 = vcmask 1048064
    %v1120 = vsel %vm1119, %v1078, -inf
    %1121 = vmax.xlane.f32.xlu0 %v1120
    %v1122 = vpop.xlane.xlu0 %1121
    %v1123 = vsel %vm1119, %v1080, -inf
    %1124 = vmax.xlane.f32.xlu0 %v1123
    %v1125 = vpop.xlane.xlu0 %1124
    %v1126 = vsub.f32 %v1078, %v1122
    %v1127 = vsub.f32 %v1080, %v1125
    %v1128 = vmul.f32 %v1126, 1.442695
    %v1129 = vpow.pop %v1128
    %v1130 = vmul.f32 %v1127, 1.442695
    %v1131 = vpow.pop %v1130
    %1134 = vrot.lane.b32.xlu0 %v1129, 64
    %v1135 = vpop.permute.xlu0 %1134
    %1136 = vrot.lane.b32.xlu0 %v1131, 64
    %v1137 = vpop.permute.xlu0 %1136
    %v1140 = vsel %vm1096, %v1135, 0.0
    %1141 = vadd.xlane.f32.xlu0 %v1140
    %v1142 = vpop.xlane.xlu0 %1141
    %v1143 = vsel %vm1096, %v1137, 0.0
    %1144 = vadd.xlane.f32.xlu0 %v1143
    %v1145 = vpop.xlane.xlu0 %1144
    %v1146 = vrcp.pop %v1142
    %v1147 = vrcp.pop %v1145
    %v1148 = vmul.f32 %v1129, %v1146
    %v1149 = vmul.f32 %v1131, %v1147
    %v1150 = vsel %vm1096, %v1092, -inf
    %1151 = vmax.xlane.f32.xlu0 %v1150
    %v1152 = vpop.xlane.xlu0 %1151
    %v1153 = vsel %vm1096, %v1094, -inf
    %1154 = vmax.xlane.f32.xlu0 %v1153
    %v1155 = vpop.xlane.xlu0 %1154
    %v1156 = vsub.f32 %v1092, %v1152
    %v1157 = vsub.f32 %v1094, %v1155
    %v1158 = vmul.f32 %v1156, 1.442695
    %v1159 = vpow.pop %v1158
    %v1160 = vmul.f32 %v1157, 1.442695
    %v1161 = vpow.pop %v1160
    %v1162 = vsel %vm1096, %v1159, 0.0
    %1163 = vadd.xlane.f32.xlu0 %v1162
    %v1164 = vpop.xlane.xlu0 %1163
    %v1165 = vsel %vm1096, %v1161, 0.0
    %1166 = vadd.xlane.f32.xlu0 %v1165
    %v1167 = vpop.xlane.xlu0 %1166
    %v1168 = vrcp.pop %v1164
    %v1169 = vrcp.pop %v1167
    %v1170 = vmul.f32 %v1159, %v1168
    %v1171 = vmul.f32 %v1161, %v1169
    %v1172 = vsel %vm1119, %v1092, -inf
    %1173 = vmax.xlane.f32.xlu0 %v1172
    %v1174 = vpop.xlane.xlu0 %1173
    %v1175 = vsel %vm1119, %v1094, -inf
    %1176 = vmax.xlane.f32.xlu0 %v1175
    %v1177 = vpop.xlane.xlu0 %1176
    %v1178 = vsub.f32 %v1092, %v1174
    %v1179 = vsub.f32 %v1094, %v1177
    %v1180 = vmul.f32 %v1178, 1.442695
    %v1181 = vpow.pop %v1180
    %v1182 = vmul.f32 %v1179, 1.442695
    %v1183 = vpow.pop %v1182
    %1186 = vrot.lane.b32.xlu0 %v1181, 64
    %v1187 = vpop.permute.xlu0 %1186
    %1188 = vrot.lane.b32.xlu0 %v1183, 64
    %v1189 = vpop.permute.xlu0 %1188
    %v1192 = vsel %vm1096, %v1187, 0.0
    %1193 = vadd.xlane.f32.xlu0 %v1192
    %v1194 = vpop.xlane.xlu0 %1193
    %v1195 = vsel %vm1096, %v1189, 0.0
    %1196 = vadd.xlane.f32.xlu0 %v1195
    %v1197 = vpop.xlane.xlu0 %1196
    %v1198 = vrcp.pop %v1194
    %v1199 = vrcp.pop %v1197
    %v1200 = vmul.f32 %v1181, %v1198
    %v1201 = vmul.f32 %v1183, %v1199
    %v1202 = vsel %vm1096, %v1117, %v1148
    %v1203 = vsel %vm1096, %v1118, %v1149
    %v1204 = vsel %vm1096, %v1170, %v1200
    %v1205 = vsel %vm1096, %v1171, %v1201
    %v1206 = vpack.c.bf16 %v1203, %v1202
    %v1207 = vpack.c.bf16 %v1205, %v1204
    %v1208 = vld [vmem:[%s18] sm:$0xf]
    %v1209 = vld [vmem:[%s18 + $0x4] sm:$0xf]
    %v1210 = vld [vmem:[%s18 + $0x8] sm:$0xf]
    %v1211 = vld [vmem:[%s18 + $0xc] sm:$0xf]
    %v1212 = vld [vmem:[%s18 + $0x10] sm:$0xf]
    %v1213 = vld [vmem:[%s18 + $0x14] sm:$0xf]
    %v1214 = vld [vmem:[%s18 + $0x18] sm:$0xf]
    %v1215 = vld [vmem:[%s18 + $0x1c] sm:$0xf]
    %v1216 = vld [vmem:[%s18 + $0x20] sm:$0xf]
    %v1217 = vld [vmem:[%s18 + $0x24] sm:$0xf]
    %v1218 = vld [vmem:[%s18 + $0x28] sm:$0xf]
    %v1219 = vld [vmem:[%s18 + $0x2c] sm:$0xf]
    %v1220 = vld [vmem:[%s18 + $0x30] sm:$0xf]
    %v1221 = vld [vmem:[%s18 + $0x34] sm:$0xf]
    %v1222 = vld [vmem:[%s18 + $0x38] sm:$0xf]
    %v1223 = vld [vmem:[%s18 + $0x3c] sm:$0xf]
    %v1224 = vld [vmem:[%s18 + $0x40] sm:$0xf]
    %v1225 = vld [vmem:[%s18 + $0x44] sm:$0xf]
    %v1226 = vld [vmem:[%s18 + $0x48] sm:$0xf]
    %v1227 = vld [vmem:[%s18 + $0x4c] sm:$0xf]
    %v1228 = vld [vmem:[%s18 + $0x50] sm:$0xf]
    %v1229 = vld [vmem:[%s18 + $0x54] sm:$0xf]
    %v1230 = vld [vmem:[%s18 + $0x58] sm:$0xf]
    %v1231 = vld [vmem:[%s18 + $0x5c] sm:$0xf]
    %v1232 = vld [vmem:[%s18 + $0x60] sm:$0xf]
    %v1233 = vld [vmem:[%s18 + $0x64] sm:$0xf]
    %v1234 = vld [vmem:[%s18 + $0x68] sm:$0xf]
    %v1235 = vld [vmem:[%s18 + $0x6c] sm:$0xf]
    %v1236 = vld [vmem:[%s18 + $0x70] sm:$0xf]
    %v1237 = vld [vmem:[%s18 + $0x74] sm:$0xf]
    %v1238 = vld [vmem:[%s18 + $0x78] sm:$0xf]
    %v1239 = vld [vmem:[%s18 + $0x7c] sm:$0xf]
    %v1272 = vunpack.c.l.b16 %v1208
    %v1273 = vunpack.c.l.b16 %v1209
    %v1274 = vunpack.c.l.b16 %v1210
    %v1275 = vunpack.c.l.b16 %v1211
    %v1276 = vunpack.c.l.b16 %v1212
    %v1277 = vunpack.c.l.b16 %v1213
    %v1278 = vunpack.c.l.b16 %v1214
    %v1279 = vunpack.c.l.b16 %v1215
    %v1280 = vunpack.c.l.b16 %v1216
    %v1281 = vunpack.c.l.b16 %v1217
    %v1282 = vunpack.c.l.b16 %v1218
    %v1283 = vunpack.c.l.b16 %v1219
    %v1284 = vunpack.c.l.b16 %v1220
    %v1285 = vunpack.c.l.b16 %v1221
    %v1286 = vunpack.c.l.b16 %v1222
    %v1287 = vunpack.c.l.b16 %v1223
    %v1288 = vunpack.c.l.b16 %v1224
    %v1289 = vunpack.c.l.b16 %v1225
    %v1290 = vunpack.c.l.b16 %v1226
    %v1291 = vunpack.c.l.b16 %v1227
    %v1292 = vunpack.c.l.b16 %v1228
    %v1293 = vunpack.c.l.b16 %v1229
    %v1294 = vunpack.c.l.b16 %v1230
    %v1295 = vunpack.c.l.b16 %v1231
    %v1296 = vunpack.c.l.b16 %v1232
    %v1297 = vunpack.c.l.b16 %v1233
    %v1298 = vunpack.c.l.b16 %v1234
    %v1299 = vunpack.c.l.b16 %v1235
    %v1300 = vunpack.c.l.b16 %v1236
    %v1301 = vunpack.c.l.b16 %v1237
    %v1302 = vunpack.c.l.b16 %v1238
    %v1303 = vunpack.c.l.b16 %v1239
    %v1304 = vpack.c.b16 %v1273, %v1272
    %v1305 = vpack.c.b16 %v1275, %v1274
    %v1306 = vpack.c.b16 %v1277, %v1276
    %v1307 = vpack.c.b16 %v1279, %v1278
    %v1308 = vpack.c.b16 %v1281, %v1280
    %v1309 = vpack.c.b16 %v1283, %v1282
    %v1310 = vpack.c.b16 %v1285, %v1284
    %v1311 = vpack.c.b16 %v1287, %v1286
    %v1312 = vpack.c.b16 %v1289, %v1288
    %v1313 = vpack.c.b16 %v1291, %v1290
    %v1314 = vpack.c.b16 %v1293, %v1292
    %v1315 = vpack.c.b16 %v1295, %v1294
    %v1316 = vpack.c.b16 %v1297, %v1296
    %v1317 = vpack.c.b16 %v1299, %v1298
    %v1318 = vpack.c.b16 %v1301, %v1300
    %v1319 = vpack.c.b16 %v1303, %v1302
    %1336 = vmatpush.bf16.msra.mxu0 %v1311
    %1337 = vmatpush.bf16.msra.mxu0 %v1310
    %1338 = vmatpush.bf16.msra.mxu0 %v1309
    %1339 = vmatpush.bf16.msra.mxu0 %v1308
    %1340 = vmatpush.bf16.msra.mxu0 %v1307
    %1341 = vmatpush.bf16.msra.mxu0 %v1306
    %1342 = vmatpush.bf16.msra.mxu0 %v1305
    %1343 = vmatpush.bf16.msra.mxu0 %v1304
    %1344 = vmatmul.bf16.gmra.mxu0 %v1206
    %v1345 = vpop.f32.mrf.mxu0
    %v1346 = vadd.f32 0.0, %v1345
    %v1347 = vpop.f32.mrf.mxu0
    %v1348 = vadd.f32 0.0, %v1347
    %1349 = vdwg.mxu0
    %1350 = vmatpush.bf16.msra.mxu0 %v1319
    %1351 = vmatpush.bf16.msra.mxu0 %v1318
    %1352 = vmatpush.bf16.msra.mxu0 %v1317
    %1353 = vmatpush.bf16.msra.mxu0 %v1316
    %1354 = vmatpush.bf16.msra.mxu0 %v1315
    %1355 = vmatpush.bf16.msra.mxu0 %v1314
    %1356 = vmatpush.bf16.msra.mxu0 %v1313
    %1357 = vmatpush.bf16.msra.mxu0 %v1312
    %1358 = vmatmul.bf16.gmra.mxu0 %v1207
    %v1359 = vpop.f32.mrf.mxu0
    %v1360 = vadd.f32 %v1346, %v1359
    %v1361 = vpop.f32.mrf.mxu0
    %v1362 = vadd.f32 %v1348, %v1361
    %1363 = vdwg.mxu0
    %v1364 = vadd.f32 %v915, %v1360
    %v1365 = vadd.f32 %v916, %v1362
    %1366 = vst.msk [vmem:[#allocation2] sm:$0xff] %vm74, %v1364
    %1367 = vst.msk [vmem:[#allocation2 + $0x8] sm:$0xff] %vm74, %v1365
    // Predicated region
    $region78: #{tpu_custom_call.1} parent=1 // pred_check
      _
    $region79: #{tpu_custom_call.1} parent=1 // pred_check_branch
      %1369 = sbr.rel (0) target = $region81
    $region80: #{tpu_custom_call.1} parent=1 // pred_region
      %1371 = vsyncadd [#allocation3], 0
      %s1372 = sshll.u32 [#allocation2], 4
      %s1373 = int_to_ptr.vmem [resolvable:$true] %s1372
      %s1374 = sshll.u32 %s19, 4
      %s1375 = int_to_ptr.hbm [resolvable:$true] %s1374
      %1380 = dma.vmem_to_hbm [thread:$0]  %s1373, 256, %s1375, [#allocation3], 128, 128, 8
    $region81: #{tpu_custom_call.1} parent=1 // pred_fallthru
      _
    // Predicated region
    $region82: #{tpu_custom_call.1} parent=1 // pred_check
      _
    $region83: #{tpu_custom_call.1} parent=1 // pred_check_branch
      %1382 = sbr.rel (0) target = $region85
    $region84: #{tpu_custom_call.1} parent=1 // pred_region
      %1384 = dma.done [#allocation3], 256
    $region85: #{tpu_custom_call.1} parent=1 // pred_fallthru
      _
    %1385 = vsyncpa [#allocation3], 1

</llo_original>
